<compile_context>
chip_gen: v6e
topology: v6e:2x2x1
jax: 0.10.0
libtpu: 0.0.40
codegen_flags: <defaults>
</compile_context>

<pallas_src>
import math
import functools

import jax
import jax.numpy as jnp
from jax.experimental import pallas as pl
from jax.experimental.pallas import tpu as pltpu

_ON_TPU = jax.default_backend() == "tpu"
# bf16 MXU feeds on TPU; f32 elsewhere (CPU DotThunk has no BF16xBF16=F32).
_MXU_DTYPE = jnp.bfloat16 if _ON_TPU else jnp.float32


def _layernorm(x, g, b, eps=1e-6):
    # TODO(synk): eps=1e-6 matches the attention-is-all-you-need style PyTorch
    # sub-modules; nn.LayerNorm's default would be 1e-5.
    mu = jnp.mean(x, axis=-1, keepdims=True)
    var = jnp.mean((x - mu) ** 2, axis=-1, keepdims=True)
    return (x - mu) * jax.lax.rsqrt(var + eps) * g + b


def seq_mapping_kernel(xT_full_ref, xT_q_ref, xq_ref, bias_ref,
                       wqT_ref, wkvT_ref, woT_ref,
                       g1_ref, b1_ref,
                       wf1_ref, bf1_ref, wf2_ref, bf2_ref,
                       g2_ref, b2_ref,
                       o_ref,
                       k_scr, v_scr,
                       *, head_num, dim_mid, hidden_chunk):
    f32 = jnp.float32
    cdt = k_scr.dtype                      # MXU feed dtype (bf16 on TPU)
    H, dm = head_num, dim_mid
    hdm = H * dm
    S = xT_full_ref.shape[2]
    TQ = xq_ref.shape[1]
    D = xq_ref.shape[2]
    hidden = wf1_ref.shape[1]

    # ---- K/V projection: once per sequence (first query tile only) ---------
    # One fused full-width (2*H*dm) matmul straight off the pre-transposed x
    # (no in-kernel x transpose); results stay head-split in VMEM scratch and
    # are reused by every query tile of this sequence.
    @pl.when(pl.program_id(1) == 0)
    def _():
        kv_T = jnp.dot(wkvT_ref[...], xT_full_ref[0],
                       preferred_element_type=f32)              # (2*hdm, S)
        v_scr[...] = kv_T[hdm:].reshape(H, dm, S).astype(cdt)   # (H, dm, S)
        # K needs (head, key, dim): H small 2-D transposes, once per sequence.
        for h in range(H):
            k_scr[h] = kv_T[h * dm:(h + 1) * dm, :].T.astype(cdt)
        # TODO(synk): for long S amortize this across the first few q tiles
        # (v5e) or hoist it into its own parallel pallas_call (v7x, B=1).

    # ---- Q projection (1/sqrt(dm) folded into wq) + batched-head attention -
    q_T = jnp.dot(wqT_ref[...], xT_q_ref[0],
                  preferred_element_type=f32)                   # (hdm, TQ)
    q_h = q_T.reshape(H, dm, TQ).astype(cdt)                    # (H, dm, TQ)

    bias = bias_ref[0]                                          # (S, 1): 0 keep / -1e9 masked

    s = jnp.einsum("hkd,hdq->hkq", k_scr[...], q_h,
                   preferred_element_type=f32)                  # (H, S, TQ)
    s = s + bias
    s = s - jnp.max(s, axis=1, keepdims=True)                   # softmax over keys
    p = jnp.exp(s)
    denom = jnp.sum(p, axis=1, keepdims=True)
    if _ON_TPU:
        p = p * pl.reciprocal(denom, approx=True)               # EUP slot
    else:
        p = p / denom
    # TODO(synk): flash-style online softmax over key tiles for S >~ 2-4K to
    # cap the (H, S, TQ) f32 footprint on 64 MiB v7x.

    ctx = jnp.einsum("hdk,hkq->hdq", v_scr[...], p.astype(cdt),
                     preferred_element_type=f32)                # (H, dm, TQ)
    # The single surviving per-tile transpose: (D, TQ) -> (TQ, D).
    attn = jnp.dot(woT_ref[...], ctx.reshape(hdm, TQ).astype(cdt),
                   preferred_element_type=f32).T                # (TQ, D)
    # TODO(synk): attention / FFN dropout omitted (eval-mode identity).

    h1 = _layernorm(xq_ref[0] + attn, g1_ref[...], b1_ref[...])  # (TQ, D) f32

    # ---- Position-wise feed-forward, chunked over the hidden dim -----------
    h1c = h1.astype(cdt)
    ff = jnp.zeros((TQ, D), f32)
    for c in range(0, hidden, hidden_chunk):
        a = jnp.dot(h1c, wf1_ref[:, c:c + hidden_chunk],
                    preferred_element_type=f32)
        a = jnp.maximum(a + bf1_ref[:, c:c + hidden_chunk], 0.0)
        ff = ff + jnp.dot(a.astype(cdt), wf2_ref[c:c + hidden_chunk, :],
                          preferred_element_type=f32)
    ff = ff + bf2_ref[...]
    # TODO(synk): for very large D*hidden also stream wf1/wf2 from HBM (extra
    # grid axis / manual DMA) instead of keeping them fully VMEM-resident.

    o_ref[0] = _layernorm(h1 + ff, g2_ref[...], b2_ref[...]).astype(o_ref.dtype)


def _vmem_capacity_bytes():
    cap = 64 * 1024 * 1024                 # conservative default (v7x per-TC)
    if _ON_TPU:
        try:
            cap = int(pltpu.get_tpu_info().vmem_capacity_bytes)
        except Exception:
            pass
    return cap


def _pick_block_q(seq_len, head_num, vmem_cap):
    # Generation-aware: 128 MiB parts (v5e/v6e) prefer big tiles (MXU-bound);
    # 64 MiB v7x prefers 256/128 so the f32 softmax intermediates
    # (~10 bytes/element of (H, S, TQ)) stay resident.
    prefs = (512, 256, 128) if vmem_cap >= 96 * 1024 * 1024 else (256, 128, 512)
    budget = int(vmem_cap * 0.40)
    fallback = None
    for c in prefs:
        if seq_len % c:
            continue
        if fallback is None:
            fallback = c
        if head_num * seq_len * c * 10 <= budget:
            return c
    if fallback is not None:
        return fallback
    # TODO(synk): pad S (and D/hidden) to multiples of 128 for large unaligned
    # configs so output stores stay lane-dense.
    return seq_len


def _spec(shape, idx, *, single_buffer=False):
    # Grid-constant operands: drop the second pipeline buffer (pure VMEM win).
    if single_buffer and _ON_TPU and hasattr(pl, "Buffered"):
        try:
            return pl.BlockSpec(shape, idx, pipeline_mode=pl.Buffered(1))
        except Exception:
            pass
    return pl.BlockSpec(shape, idx)


def sequence_mapping_layer(x, params, mask=None, *, head_num, dim_mid):
    B, S, D = x.shape
    hdm = head_num * dim_mid
    hidden = params["wf1"].shape[1]
    cdt = _MXU_DTYPE
    bpe = jnp.dtype(cdt).itemsize

    vmem_cap = _vmem_capacity_bytes()
    TQ = _pick_block_q(S, head_num, vmem_cap)
    n_q_tiles = S // TQ

    # FFN hidden-dim chunk bounds the (TQ, chunk) f32 activation.
    hidden_chunk = hidden
    if hidden > 2048:
        for c in (2048, 1024, 512):
            if hidden % c == 0:
                hidden_chunk = c
                break

    # Additive mask bias (0 keep / -1e9 masked), computed once in the wrapper.
    if mask is None:
        bias = jnp.zeros((B, S, 1), jnp.float32)
    else:
        bias = (mask.reshape(B, S, 1).astype(jnp.float32) - 1.0) * 1e9

    # Pre-transposed MXU-dtype x for projections (no in-kernel x transposes,
    # half the DMA bytes); f32 x kept only for the residual/LayerNorm path.
    xT = jnp.swapaxes(x, 1, 2).astype(cdt)                     # (B, D, S)
    xf = x.astype(jnp.float32)                                 # (B, S, D)

    scale = 1.0 / math.sqrt(dim_mid)
    wqT = (params["wq"] * scale).T.astype(cdt)                 # (hdm, D), scale folded
    wkvT = jnp.concatenate([params["wk"], params["wv"]], axis=1).T.astype(cdt)
    woT = params["wo"].T.astype(cdt)                           # (D, hdm)
    wf1 = params["wf1"].astype(cdt)
    wf2 = params["wf2"].astype(cdt)

    const = lambda b, qi: (0, 0)
    in_specs = [
        _spec((1, D, S), lambda b, qi: (b, 0, 0), single_buffer=True),  # xT (full, K/V)
        pl.BlockSpec((1, D, TQ), lambda b, qi: (b, 0, qi)),             # xT (q tile)
        pl.BlockSpec((1, TQ, D), lambda b, qi: (b, qi, 0)),             # x f32 (residual)
        _spec((1, S, 1), lambda b, qi: (b, 0, 0), single_buffer=True),  # mask bias
        _spec((hdm, D), const, single_buffer=True),                     # wq^T / sqrt(dm)
        _spec((2 * hdm, D), const, single_buffer=True),                 # [wk|wv]^T
        _spec((D, hdm), const, single_buffer=True),                     # wo^T
        _spec((1, D), const, single_buffer=True),                       # ln1 gamma
        _spec((1, D), const, single_buffer=True),                       # ln1 beta
        _spec((D, hidden), const, single_buffer=True),                  # ffn w1
        _spec((1, hidden), const, single_buffer=True),                  # ffn b1
        _spec((hidden, D), const, single_buffer=True),                  # ffn w2
        _spec((1, D), const, single_buffer=True),                       # ffn b2
        _spec((1, D), const, single_buffer=True),                       # ln2 gamma
        _spec((1, D), const, single_buffer=True),                       # ln2 beta
    ]

    # VMEM budget from actual residency (single-buffered weights + pipelined
    # tiles + K/V scratch + per-tile f32 intermediates), clamped to capacity.
    weight_bytes = (4 * hdm * D + 2 * D * hidden) * bpe
    io_bytes = (D * S * bpe + 2 * D * TQ * bpe + 2 * TQ * D * 4
                + 2 * TQ * D * jnp.dtype(x.dtype).itemsize + S * 128 * 4)
    scratch_bytes = 2 * head_num * S * dim_mid * bpe
    interm_bytes = head_num * S * TQ * (8 + bpe) + 2 * TQ * max(hidden_chunk, D) * 4
    est = int(1.25 * (weight_bytes + io_bytes + scratch_bytes + interm_bytes))
    vmem_limit = max(32 * 1024 * 1024, min(est, int(vmem_cap * 0.9)))

    kernel = functools.partial(seq_mapping_kernel,
                               head_num=head_num, dim_mid=dim_mid,
                               hidden_chunk=hidden_chunk)

    return pl.pallas_call(
        kernel,
        out_shape=jax.ShapeDtypeStruct((B, S, D), x.dtype),
        grid_spec=pltpu.PrefetchScalarGridSpec(
            num_scalar_prefetch=0,
            grid=(B, n_q_tiles),
            in_specs=in_specs,
            out_specs=pl.BlockSpec((1, TQ, D), lambda b, qi: (b, qi, 0)),
            scratch_shapes=[
                pltpu.VMEM((head_num, S, dim_mid), cdt),   # K (head, key, dim)
                pltpu.VMEM((head_num, dim_mid, S), cdt),   # V (head, dim, key)
            ],
        ),
        compiler_params=pltpu.CompilerParams(
            # batch -> megacore-parallel; q-tile axis must stay sequential so
            # the per-sequence K/V scratch written at qi==0 is reused.
            # TODO(synk): for B=1 on v7x, hoist the K/V projection into its own
            # parallel pallas_call so q tiles can also be split across cores.
            dimension_semantics=("parallel", "arbitrary"),
            vmem_limit_bytes=vmem_limit,
        ),
    )(xT, xT, xf, bias,
      wqT, wkvT, woT,
      params["g1"], params["b1"],
      wf1, params["bf1"], wf2, params["bf2"],
      params["g2"], params["b2"])


def _reference(x, params, mask, head_num, dim_mid):
    """Pure-JAX reference mirroring the kernel's precision policy
    (bf16 MXU feeds on TPU, f32 elsewhere; f32 accumulation/softmax/LN)."""
    B, S, D = x.shape
    H, dm = head_num, dim_mid
    cdt, f32 = _MXU_DTYPE, jnp.float32

    def mm(a, b):
        return jnp.einsum("...k,kn->...n", a.astype(cdt), b.astype(cdt),
                          preferred_element_type=f32)

    q, k, v = mm(x, params["wq"]), mm(x, params["wk"]), mm(x, params["wv"])

    def split(t):  # (B,S,H*dm) -> (B,H,S,dm)
        return t.reshape(B, S, H, dm).transpose(0, 2, 1, 3)

    qh, kh, vh = split(q), split(k), split(v)
    s = jnp.einsum("bhqd,bhkd->bhqk", qh.astype(cdt), kh.astype(cdt),
                   preferred_element_type=f32) / math.sqrt(dm)
    s = jnp.where(mask[:, None, :, :] > 0.0, s, s - 1e9)
    p = jax.nn.softmax(s, axis=-1)
    o = jnp.einsum("bhqk,bhkd->bhqd", p.astype(cdt), vh.astype(cdt),
                   preferred_element_type=f32)
    o = o.transpose(0, 2, 1, 3).reshape(B, S, H * dm)
    o = mm(o, params["wo"])

    def ln(t, g, b, eps=1e-6):
        mu = jnp.mean(t, -1, keepdims=True)
        var = jnp.mean((t - mu) ** 2, -1, keepdims=True)
        return (t - mu) * jax.lax.rsqrt(var + eps) * g + b

    h1 = ln(x + o, params["g1"], params["b1"])
    ff = jnp.maximum(mm(h1, params["wf1"]) + params["bf1"], 0.0)
    ff = mm(ff, params["wf2"]) + params["bf2"]
    return ln(h1 + ff, params["g2"], params["b2"])


if __name__ == "__main__":
    B, S = 2, 8
    dim_x, dim_mid, head_num, hidden_dim = 32, 16, 4, 64
    hdm = head_num * dim_mid

    key = jax.random.PRNGKey(0)
    ks = jax.random.split(key, 9)

    params = {
        "wq":  jax.random.normal(ks[0], (dim_x, hdm), jnp.float32) * 0.05,
        "wk":  jax.random.normal(ks[1], (dim_x, hdm), jnp.float32) * 0.05,
        "wv":  jax.random.normal(ks[2], (dim_x, hdm), jnp.float32) * 0.05,
        "wo":  jax.random.normal(ks[3], (hdm, dim_x), jnp.float32) * 0.05,
        "g1":  jnp.ones((1, dim_x), jnp.float32),
        "b1":  jnp.zeros((1, dim_x), jnp.float32),
        "wf1": jax.random.normal(ks[4], (dim_x, hidden_dim), jnp.float32) * 0.05,
        "bf1": jax.random.normal(ks[5], (1, hidden_dim), jnp.float32) * 0.01,
        "wf2": jax.random.normal(ks[6], (hidden_dim, dim_x), jnp.float32) * 0.05,
        "bf2": jax.random.normal(ks[7], (1, dim_x), jnp.float32) * 0.01,
        "g2":  jnp.ones((1, dim_x), jnp.float32),
        "b2":  jnp.zeros((1, dim_x), jnp.float32),
    }

    x = jax.random.normal(ks[8], (B, S, dim_x), jnp.float32)
    mask = jnp.ones((B, 1, S), jnp.float32)   # x_mask=None case

    out = sequence_mapping_layer(x, params, mask=mask,
                                 head_num=head_num, dim_mid=dim_mid)
    out = jax.block_until_ready(out)

    ref = _reference(x, params, mask, head_num, dim_mid)
    assert out.shape == (B, S, dim_x)
    # bf16 MXU feeds + approx-reciprocal softmax on TPU -> slightly looser
    # tolerance than a pure-f32 comparison would allow.
    assert jnp.allclose(out, ref, rtol=2e-2, atol=2e-2), "mismatch vs JAX reference"

    print("KERNEL_OK")
</pallas_src>

<mosaic_0001>
module attributes {stable_mosaic.version = 11 : i64} {
  func.func @seq_mapping_kernel(%arg0: i32, %arg1: i32, %arg2: memref<1x32x8xf32, #tpu.memory_space<vmem>>, %arg3: memref<1x32x8xf32, #tpu.memory_space<vmem>>, %arg4: memref<1x8x32xf32, #tpu.memory_space<vmem>>, %arg5: memref<1x8x1xf32, #tpu.memory_space<vmem>>, %arg6: memref<64x32xf32, #tpu.memory_space<vmem>>, %arg7: memref<128x32xf32, #tpu.memory_space<vmem>>, %arg8: memref<32x64xf32, #tpu.memory_space<vmem>>, %arg9: memref<1x32xf32, #tpu.memory_space<vmem>>, %arg10: memref<1x32xf32, #tpu.memory_space<vmem>>, %arg11: memref<32x64xf32, #tpu.memory_space<vmem>>, %arg12: memref<1x64xf32, #tpu.memory_space<vmem>>, %arg13: memref<64x32xf32, #tpu.memory_space<vmem>>, %arg14: memref<1x32xf32, #tpu.memory_space<vmem>>, %arg15: memref<1x32xf32, #tpu.memory_space<vmem>>, %arg16: memref<1x32xf32, #tpu.memory_space<vmem>>, %arg17: memref<1x8x32xf32, #tpu.memory_space<vmem>>, %arg18: memref<4x8x16xf32, #tpu.memory_space<vmem>>, %arg19: memref<4x16x8xf32, #tpu.memory_space<vmem>>) attributes {dimension_semantics = [#tpu.dimension_semantics<parallel>, #tpu.dimension_semantics<arbitrary>], iteration_bounds = array<i64: 2, 1>, scalar_prefetch = 0 : i64, scratch_operands = 2 : i64, tpu.core_type = #tpu.core_type<tc>, window_params = [{transform_indices = @transform_0, window_bounds = array<i64: 1, 32, 8>}, {transform_indices = @transform_1, window_bounds = array<i64: 1, 32, 8>}, {transform_indices = @transform_2, window_bounds = array<i64: 1, 8, 32>}, {transform_indices = @transform_3, window_bounds = array<i64: 1, 8, 1>}, {pipeline_mode = #tpu.pipeline_mode<synchronous>, transform_indices = @transform_4, window_bounds = array<i64: 64, 32>}, {pipeline_mode = #tpu.pipeline_mode<synchronous>, transform_indices = @transform_5, window_bounds = array<i64: 128, 32>}, {pipeline_mode = #tpu.pipeline_mode<synchronous>, transform_indices = @transform_6, window_bounds = array<i64: 32, 64>}, {pipeline_mode = #tpu.pipeline_mode<synchronous>, transform_indices = @transform_7, window_bounds = array<i64: 1, 32>}, {pipeline_mode = #tpu.pipeline_mode<synchronous>, transform_indices = @transform_8, window_bounds = array<i64: 1, 32>}, {pipeline_mode = #tpu.pipeline_mode<synchronous>, transform_indices = @transform_9, window_bounds = array<i64: 32, 64>}, {pipeline_mode = #tpu.pipeline_mode<synchronous>, transform_indices = @transform_10, window_bounds = array<i64: 1, 64>}, {pipeline_mode = #tpu.pipeline_mode<synchronous>, transform_indices = @transform_11, window_bounds = array<i64: 64, 32>}, {pipeline_mode = #tpu.pipeline_mode<synchronous>, transform_indices = @transform_12, window_bounds = array<i64: 1, 32>}, {pipeline_mode = #tpu.pipeline_mode<synchronous>, transform_indices = @transform_13, window_bounds = array<i64: 1, 32>}, {pipeline_mode = #tpu.pipeline_mode<synchronous>, transform_indices = @transform_14, window_bounds = array<i64: 1, 32>}, {transform_indices = @transform_15, window_bounds = array<i64: 1, 8, 32>}]} {
    %c0_i32 = arith.constant 0 : i32
    %0 = arith.cmpi eq, %arg1, %c0_i32 : i32
    %1 = arith.extui %0 : i1 to i32
    %c0_i32_0 = arith.constant 0 : i32
    %2 = arith.cmpi ne, %1, %c0_i32_0 : i32
    scf.if %2 {
      %c0_57 = arith.constant 0 : index
      %c0_58 = arith.constant 0 : index
      %99 = vector.load %arg7[%c0_57, %c0_58] : memref<128x32xf32, #tpu.memory_space<vmem>>, vector<128x32xf32>
      %c0_59 = arith.constant 0 : index
      %c0_60 = arith.constant 0 : index
      %c0_61 = arith.constant 0 : index
      %100 = vector.load %arg2[%c0_59, %c0_60, %c0_61] : memref<1x32x8xf32, #tpu.memory_space<vmem>>, vector<1x32x8xf32>
      %101 = vector.shape_cast %100 : vector<1x32x8xf32> to vector<32x8xf32>
      %cst_62 = arith.constant dense<0.000000e+00> : vector<128x8xf32>
      %102 = tpu.matmul %99, %101, %cst_62 {dimension_numbers = #tpu.dot_dimension_numbers<[1], [0], [0], [1], [0, 0, 1, 1], [], []>} : vector<128x32xf32>, vector<32x8xf32>, vector<128x8xf32> -> vector<128x8xf32>
      %103 = vector.extract_strided_slice %102 {offsets = [64, 0], sizes = [64, 8], strides = [1, 1]} : vector<128x8xf32> to vector<64x8xf32>
      %104 = vector.shape_cast %103 : vector<64x8xf32> to vector<4x16x8xf32>
      %c0_63 = arith.constant 0 : index
      %c0_64 = arith.constant 0 : index
      %c0_65 = arith.constant 0 : index
      %105 = vector.load %arg19[%c0_63, %c0_64, %c0_65] : memref<4x16x8xf32, #tpu.memory_space<vmem>>, vector<4x16x8xf32>
      tpu.vector_store %arg19[%c0_63, %c0_64, %c0_65], %104 {strides = array<i32>} : memref<4x16x8xf32, #tpu.memory_space<vmem>>, vector<4x16x8xf32>,
      %106 = vector.extract_strided_slice %102 {offsets = [0, 0], sizes = [16, 8], strides = [1, 1]} : vector<128x8xf32> to vector<16x8xf32>
      %107 = tpu.transpose %106, [1, 0] : vector<16x8xf32> -> vector<8x16xf32>
      %c0_66 = arith.constant 0 : index
      %c0_67 = arith.constant 0 : index
      %c0_68 = arith.constant 0 : index
      %108 = vector.load %arg18[%c0_66, %c0_67, %c0_68] : memref<4x8x16xf32, #tpu.memory_space<vmem>>, vector<1x8x16xf32>
      %109 = vector.shape_cast %108 : vector<1x8x16xf32> to vector<8x16xf32>
      %110 = vector.shape_cast %107 : vector<8x16xf32> to vector<1x8x16xf32>
      tpu.vector_store %arg18[%c0_66, %c0_67, %c0_68], %110 {strides = array<i32>} : memref<4x8x16xf32, #tpu.memory_space<vmem>>, vector<1x8x16xf32>,
      %111 = vector.extract_strided_slice %102 {offsets = [16, 0], sizes = [16, 8], strides = [1, 1]} : vector<128x8xf32> to vector<16x8xf32>
      %112 = tpu.transpose %111, [1, 0] : vector<16x8xf32> -> vector<8x16xf32>
      %c1 = arith.constant 1 : index
      %c0_69 = arith.constant 0 : index
      %c0_70 = arith.constant 0 : index
      %113 = vector.load %arg18[%c1, %c0_69, %c0_70] : memref<4x8x16xf32, #tpu.memory_space<vmem>>, vector<1x8x16xf32>
      %114 = vector.shape_cast %113 : vector<1x8x16xf32> to vector<8x16xf32>
      %115 = vector.shape_cast %112 : vector<8x16xf32> to vector<1x8x16xf32>
      tpu.vector_store %arg18[%c1, %c0_69, %c0_70], %115 {strides = array<i32>} : memref<4x8x16xf32, #tpu.memory_space<vmem>>, vector<1x8x16xf32>,
      %116 = vector.extract_strided_slice %102 {offsets = [32, 0], sizes = [16, 8], strides = [1, 1]} : vector<128x8xf32> to vector<16x8xf32>
      %117 = tpu.transpose %116, [1, 0] : vector<16x8xf32> -> vector<8x16xf32>
      %c2 = arith.constant 2 : index
      %c0_71 = arith.constant 0 : index
      %c0_72 = arith.constant 0 : index
      %118 = vector.load %arg18[%c2, %c0_71, %c0_72] : memref<4x8x16xf32, #tpu.memory_space<vmem>>, vector<1x8x16xf32>
      %119 = vector.shape_cast %118 : vector<1x8x16xf32> to vector<8x16xf32>
      %120 = vector.shape_cast %117 : vector<8x16xf32> to vector<1x8x16xf32>
      tpu.vector_store %arg18[%c2, %c0_71, %c0_72], %120 {strides = array<i32>} : memref<4x8x16xf32, #tpu.memory_space<vmem>>, vector<1x8x16xf32>,
      %121 = vector.extract_strided_slice %102 {offsets = [48, 0], sizes = [16, 8], strides = [1, 1]} : vector<128x8xf32> to vector<16x8xf32>
      %122 = tpu.transpose %121, [1, 0] : vector<16x8xf32> -> vector<8x16xf32>
      %c3 = arith.constant 3 : index
      %c0_73 = arith.constant 0 : index
      %c0_74 = arith.constant 0 : index
      %123 = vector.load %arg18[%c3, %c0_73, %c0_74] : memref<4x8x16xf32, #tpu.memory_space<vmem>>, vector<1x8x16xf32>
      %124 = vector.shape_cast %123 : vector<1x8x16xf32> to vector<8x16xf32>
      %125 = vector.shape_cast %122 : vector<8x16xf32> to vector<1x8x16xf32>
      tpu.vector_store %arg18[%c3, %c0_73, %c0_74], %125 {strides = array<i32>} : memref<4x8x16xf32, #tpu.memory_space<vmem>>, vector<1x8x16xf32>,
    } else {
    }
    %c0 = arith.constant 0 : index
    %c0_1 = arith.constant 0 : index
    %3 = vector.load %arg6[%c0, %c0_1] : memref<64x32xf32, #tpu.memory_space<vmem>>, vector<64x32xf32>
    %c0_2 = arith.constant 0 : index
    %c0_3 = arith.constant 0 : index
    %c0_4 = arith.constant 0 : index
    %4 = vector.load %arg3[%c0_2, %c0_3, %c0_4] : memref<1x32x8xf32, #tpu.memory_space<vmem>>, vector<1x32x8xf32>
    %5 = vector.shape_cast %4 : vector<1x32x8xf32> to vector<32x8xf32>
    %cst = arith.constant dense<0.000000e+00> : vector<64x8xf32>
    %6 = tpu.matmul %3, %5, %cst {dimension_numbers = #tpu.dot_dimension_numbers<[1], [0], [0], [1], [0, 0, 1, 1], [], []>} : vector<64x32xf32>, vector<32x8xf32>, vector<64x8xf32> -> vector<64x8xf32>
    %7 = vector.shape_cast %6 : vector<64x8xf32> to vector<4x16x8xf32>
    %c0_5 = arith.constant 0 : index
    %c0_6 = arith.constant 0 : index
    %c0_7 = arith.constant 0 : index
    %8 = vector.load %arg5[%c0_5, %c0_6, %c0_7] : memref<1x8x1xf32, #tpu.memory_space<vmem>>, vector<1x8x1xf32>
    %9 = vector.shape_cast %8 : vector<1x8x1xf32> to vector<8x1xf32>
    %c0_8 = arith.constant 0 : index
    %c0_9 = arith.constant 0 : index
    %c0_10 = arith.constant 0 : index
    %10 = vector.load %arg18[%c0_8, %c0_9, %c0_10] : memref<4x8x16xf32, #tpu.memory_space<vmem>>, vector<4x8x16xf32>
    "tpu.trace_start"() <{level = 10 : i32, message = "hkd,hdq->hkq"}> : () -> ()
    %cst_11 = arith.constant dense<0.000000e+00> : vector<4x8x8xf32>
    %11 = tpu.matmul %10, %7, %cst_11 {dimension_numbers = #tpu.dot_dimension_numbers<[2], [1], [1], [2], [0, 0, 0, 1, 1, 2], [0], [0]>} : vector<4x8x16xf32>, vector<4x16x8xf32>, vector<4x8x8xf32> -> vector<4x8x8xf32>
    "tpu.trace_stop"() : () -> ()
    %12 = vector.shape_cast %9 : vector<8x1xf32> to vector<1x8x1xf32>
    %13 = vector.broadcast %12 : vector<1x8x1xf32> to vector<4x8x8xf32>
    %14 = arith.addf %11, %13 : vector<4x8x8xf32>
    %cst_12 = arith.constant dense<0xFF800000> : vector<4x8xf32>
    %15 = vector.multi_reduction <maximumf>, %14, %cst_12 [1] : vector<4x8x8xf32> to vector<4x8xf32>
    %16 = vector.shape_cast %15 : vector<4x8xf32> to vector<4x1x8xf32>
    %17 = vector.broadcast %16 : vector<4x1x8xf32> to vector<4x8x8xf32>
    %18 = arith.subf %14, %17 : vector<4x8x8xf32>
    %19 = math.exp %18 : vector<4x8x8xf32>
    %cst_13 = arith.constant dense<0.000000e+00> : vector<4x8xf32>
    %20 = vector.multi_reduction <add>, %19, %cst_13 [1] : vector<4x8x8xf32> to vector<4x8xf32>
    %21 = vector.shape_cast %20 : vector<4x8xf32> to vector<4x1x8xf32>
    %22 = vector.broadcast %21 : vector<4x1x8xf32> to vector<4x8x8xf32>
    %23 = arith.divf %19, %22 : vector<4x8x8xf32>
    %c0_14 = arith.constant 0 : index
    %c0_15 = arith.constant 0 : index
    %c0_16 = arith.constant 0 : index
    %24 = vector.load %arg19[%c0_14, %c0_15, %c0_16] : memref<4x16x8xf32, #tpu.memory_space<vmem>>, vector<4x16x8xf32>
    "tpu.trace_start"() <{level = 10 : i32, message = "hdk,hkq->hdq"}> : () -> ()
    %cst_17 = arith.constant dense<0.000000e+00> : vector<4x16x8xf32>
    %25 = tpu.matmul %24, %23, %cst_17 {dimension_numbers = #tpu.dot_dimension_numbers<[2], [1], [1], [2], [0, 0, 0, 1, 1, 2], [0], [0]>} : vector<4x16x8xf32>, vector<4x8x8xf32>, vector<4x16x8xf32> -> vector<4x16x8xf32>
    "tpu.trace_stop"() : () -> ()
    %c0_18 = arith.constant 0 : index
    %c0_19 = arith.constant 0 : index
    %26 = vector.load %arg8[%c0_18, %c0_19] : memref<32x64xf32, #tpu.memory_space<vmem>>, vector<32x64xf32>
    %27 = vector.shape_cast %25 : vector<4x16x8xf32> to vector<64x8xf32>
    %cst_20 = arith.constant dense<0.000000e+00> : vector<32x8xf32>
    %28 = tpu.matmul %26, %27, %cst_20 {dimension_numbers = #tpu.dot_dimension_numbers<[1], [0], [0], [1], [0, 0, 1, 1], [], []>} : vector<32x64xf32>, vector<64x8xf32>, vector<32x8xf32> -> vector<32x8xf32>
    %29 = tpu.transpose %28, [1, 0] : vector<32x8xf32> -> vector<8x32xf32>
    %c0_21 = arith.constant 0 : index
    %c0_22 = arith.constant 0 : index
    %c0_23 = arith.constant 0 : index
    %30 = vector.load %arg4[%c0_21, %c0_22, %c0_23] : memref<1x8x32xf32, #tpu.memory_space<vmem>>, vector<1x8x32xf32>
    %31 = vector.shape_cast %30 : vector<1x8x32xf32> to vector<8x32xf32>
    %32 = arith.addf %31, %29 : vector<8x32xf32>
    %c0_24 = arith.constant 0 : index
    %c0_25 = arith.constant 0 : index
    %33 = vector.load %arg9[%c0_24, %c0_25] : memref<1x32xf32, #tpu.memory_space<vmem>>, vector<1x32xf32>
    %c0_26 = arith.constant 0 : index
    %c0_27 = arith.constant 0 : index
    %34 = vector.load %arg10[%c0_26, %c0_27] : memref<1x32xf32, #tpu.memory_space<vmem>>, vector<1x32xf32>
    %cst_28 = arith.constant dense<0.000000e+00> : vector<8xf32>
    %35 = vector.multi_reduction <add>, %32, %cst_28 [1] : vector<8x32xf32> to vector<8xf32>
    %36 = vector.shape_cast %35 : vector<8xf32> to vector<8x1xf32>
    %cst_29 = arith.constant 3.200000e+01 : f32
    %37 = vector.broadcast %cst_29 : f32 to vector<8x1xf32>
    %38 = arith.divf %36, %37 : vector<8x1xf32>
    %39 = vector.broadcast %38 : vector<8x1xf32> to vector<8x32xf32>
    %40 = arith.subf %32, %39 : vector<8x32xf32>
    %41 = arith.mulf %40, %40 : vector<8x32xf32>
    %cst_30 = arith.constant dense<0.000000e+00> : vector<8xf32>
    %42 = vector.multi_reduction <add>, %41, %cst_30 [1] : vector<8x32xf32> to vector<8xf32>
    %43 = vector.shape_cast %42 : vector<8xf32> to vector<8x1xf32>
    %cst_31 = arith.constant 3.200000e+01 : f32
    %44 = vector.broadcast %cst_31 : f32 to vector<8x1xf32>
    %45 = arith.divf %43, %44 : vector<8x1xf32>
    %46 = vector.broadcast %38 : vector<8x1xf32> to vector<8x32xf32>
    %47 = arith.subf %32, %46 : vector<8x32xf32>
    %cst_32 = arith.constant 9.99999997E-7 : f32
    %48 = vector.broadcast %cst_32 : f32 to vector<8x1xf32>
    %49 = arith.addf %45, %48 : vector<8x1xf32>
    %50 = math.rsqrt %49 : vector<8x1xf32>
    %51 = vector.broadcast %50 : vector<8x1xf32> to vector<8x32xf32>
    %52 = arith.mulf %47, %51 : vector<8x32xf32>
    %53 = vector.broadcast %33 : vector<1x32xf32> to vector<8x32xf32>
    %54 = arith.mulf %52, %53 : vector<8x32xf32>
    %55 = vector.broadcast %34 : vector<1x32xf32> to vector<8x32xf32>
    %56 = arith.addf %54, %55 : vector<8x32xf32>
    %cst_33 = arith.constant 0.000000e+00 : f32
    %57 = vector.broadcast %cst_33 : f32 to vector<8x32xf32>
    %c0_34 = arith.constant 0 : index
    %c0_35 = arith.constant 0 : index
    %58 = vector.load %arg11[%c0_34, %c0_35] : memref<32x64xf32, #tpu.memory_space<vmem>>, vector<32x64xf32>
    %cst_36 = arith.constant dense<0.000000e+00> : vector<8x64xf32>
    %59 = tpu.matmul %56, %58, %cst_36 {dimension_numbers = #tpu.dot_dimension_numbers<[1], [0], [0], [1], [0, 0, 1, 1], [], []>} : vector<8x32xf32>, vector<32x64xf32>, vector<8x64xf32> -> vector<8x64xf32>
    %c0_37 = arith.constant 0 : index
    %c0_38 = arith.constant 0 : index
    %60 = vector.load %arg12[%c0_37, %c0_38] : memref<1x64xf32, #tpu.memory_space<vmem>>, vector<1x64xf32>
    %61 = vector.broadcast %60 : vector<1x64xf32> to vector<8x64xf32>
    %62 = arith.addf %59, %61 : vector<8x64xf32>
    %cst_39 = arith.constant 0.000000e+00 : f32
    %63 = vector.broadcast %cst_39 : f32 to vector<8x64xf32>
    %64 = arith.maximumf %62, %63 : vector<8x64xf32>
    %c0_40 = arith.constant 0 : index
    %c0_41 = arith.constant 0 : index
    %65 = vector.load %arg13[%c0_40, %c0_41] : memref<64x32xf32, #tpu.memory_space<vmem>>, vector<64x32xf32>
    %cst_42 = arith.constant dense<0.000000e+00> : vector<8x32xf32>
    %66 = tpu.matmul %64, %65, %cst_42 {dimension_numbers = #tpu.dot_dimension_numbers<[1], [0], [0], [1], [0, 0, 1, 1], [], []>} : vector<8x64xf32>, vector<64x32xf32>, vector<8x32xf32> -> vector<8x32xf32>
    %67 = arith.addf %57, %66 : vector<8x32xf32>
    %c0_43 = arith.constant 0 : index
    %c0_44 = arith.constant 0 : index
    %68 = vector.load %arg14[%c0_43, %c0_44] : memref<1x32xf32, #tpu.memory_space<vmem>>, vector<1x32xf32>
    %69 = vector.broadcast %68 : vector<1x32xf32> to vector<8x32xf32>
    %70 = arith.addf %67, %69 : vector<8x32xf32>
    %71 = arith.addf %56, %70 : vector<8x32xf32>
    %c0_45 = arith.constant 0 : index
    %c0_46 = arith.constant 0 : index
    %72 = vector.load %arg15[%c0_45, %c0_46] : memref<1x32xf32, #tpu.memory_space<vmem>>, vector<1x32xf32>
    %c0_47 = arith.constant 0 : index
    %c0_48 = arith.constant 0 : index
    %73 = vector.load %arg16[%c0_47, %c0_48] : memref<1x32xf32, #tpu.memory_space<vmem>>, vector<1x32xf32>
    %cst_49 = arith.constant dense<0.000000e+00> : vector<8xf32>
    %74 = vector.multi_reduction <add>, %71, %cst_49 [1] : vector<8x32xf32> to vector<8xf32>
    %75 = vector.shape_cast %74 : vector<8xf32> to vector<8x1xf32>
    %cst_50 = arith.constant 3.200000e+01 : f32
    %76 = vector.broadcast %cst_50 : f32 to vector<8x1xf32>
    %77 = arith.divf %75, %76 : vector<8x1xf32>
    %78 = vector.broadcast %77 : vector<8x1xf32> to vector<8x32xf32>
    %79 = arith.subf %71, %78 : vector<8x32xf32>
    %80 = arith.mulf %79, %79 : vector<8x32xf32>
    %cst_51 = arith.constant dense<0.000000e+00> : vector<8xf32>
    %81 = vector.multi_reduction <add>, %80, %cst_51 [1] : vector<8x32xf32> to vector<8xf32>
    %82 = vector.shape_cast %81 : vector<8xf32> to vector<8x1xf32>
    %cst_52 = arith.constant 3.200000e+01 : f32
    %83 = vector.broadcast %cst_52 : f32 to vector<8x1xf32>
    %84 = arith.divf %82, %83 : vector<8x1xf32>
    %85 = vector.broadcast %77 : vector<8x1xf32> to vector<8x32xf32>
    %86 = arith.subf %71, %85 : vector<8x32xf32>
    %cst_53 = arith.constant 9.99999997E-7 : f32
    %87 = vector.broadcast %cst_53 : f32 to vector<8x1xf32>
    %88 = arith.addf %84, %87 : vector<8x1xf32>
    %89 = math.rsqrt %88 : vector<8x1xf32>
    %90 = vector.broadcast %89 : vector<8x1xf32> to vector<8x32xf32>
    %91 = arith.mulf %86, %90 : vector<8x32xf32>
    %92 = vector.broadcast %72 : vector<1x32xf32> to vector<8x32xf32>
    %93 = arith.mulf %91, %92 : vector<8x32xf32>
    %94 = vector.broadcast %73 : vector<1x32xf32> to vector<8x32xf32>
    %95 = arith.addf %93, %94 : vector<8x32xf32>
    %c0_54 = arith.constant 0 : index
    %c0_55 = arith.constant 0 : index
    %c0_56 = arith.constant 0 : index
    %96 = vector.load %arg17[%c0_54, %c0_55, %c0_56] : memref<1x8x32xf32, #tpu.memory_space<vmem>>, vector<1x8x32xf32>
    %97 = vector.shape_cast %96 : vector<1x8x32xf32> to vector<8x32xf32>
    %98 = vector.shape_cast %95 : vector<8x32xf32> to vector<1x8x32xf32>
    tpu.vector_store %arg17[%c0_54, %c0_55, %c0_56], %98 {strides = array<i32>} : memref<1x8x32xf32, #tpu.memory_space<vmem>>, vector<1x8x32xf32>,
    return
  }
  func.func @transform_0(%arg0: i32, %arg1: i32) -> (i32, i32, i32) {
    %c0_i32 = arith.constant 0 : i32
    %c0_i32_0 = arith.constant 0 : i32
    %c0_i32_1 = arith.constant 0 : i32
    return %arg0, %c0_i32, %c0_i32_0 : i32, i32, i32
  }
  func.func @transform_1(%arg0: i32, %arg1: i32) -> (i32, i32, i32) {
    %c0_i32 = arith.constant 0 : i32
    %c0_i32_0 = arith.constant 0 : i32
    return %arg0, %c0_i32, %arg1 : i32, i32, i32
  }
  func.func @transform_2(%arg0: i32, %arg1: i32) -> (i32, i32, i32) {
    %c0_i32 = arith.constant 0 : i32
    %c0_i32_0 = arith.constant 0 : i32
    return %arg0, %arg1, %c0_i32 : i32, i32, i32
  }
  func.func @transform_3(%arg0: i32, %arg1: i32) -> (i32, i32, i32) {
    %c0_i32 = arith.constant 0 : i32
    %c0_i32_0 = arith.constant 0 : i32
    %c0_i32_1 = arith.constant 0 : i32
    return %arg0, %c0_i32, %c0_i32_0 : i32, i32, i32
  }
  func.func @transform_4(%arg0: i32, %arg1: i32) -> (i32, i32) {
    %c0_i32 = arith.constant 0 : i32
    %c0_i32_0 = arith.constant 0 : i32
    %c0_i32_1 = arith.constant 0 : i32
    return %c0_i32, %c0_i32_0 : i32, i32
  }
  func.func @transform_5(%arg0: i32, %arg1: i32) -> (i32, i32) {
    %c0_i32 = arith.constant 0 : i32
    %c0_i32_0 = arith.constant 0 : i32
    %c0_i32_1 = arith.constant 0 : i32
    return %c0_i32, %c0_i32_0 : i32, i32
  }
  func.func @transform_6(%arg0: i32, %arg1: i32) -> (i32, i32) {
    %c0_i32 = arith.constant 0 : i32
    %c0_i32_0 = arith.constant 0 : i32
    %c0_i32_1 = arith.constant 0 : i32
    return %c0_i32, %c0_i32_0 : i32, i32
  }
  func.func @transform_7(%arg0: i32, %arg1: i32) -> (i32, i32) {
    %c0_i32 = arith.constant 0 : i32
    %c0_i32_0 = arith.constant 0 : i32
    %c0_i32_1 = arith.constant 0 : i32
    return %c0_i32, %c0_i32_0 : i32, i32
  }
  func.func @transform_8(%arg0: i32, %arg1: i32) -> (i32, i32) {
    %c0_i32 = arith.constant 0 : i32
    %c0_i32_0 = arith.constant 0 : i32
    %c0_i32_1 = arith.constant 0 : i32
    return %c0_i32, %c0_i32_0 : i32, i32
  }
  func.func @transform_9(%arg0: i32, %arg1: i32) -> (i32, i32) {
    %c0_i32 = arith.constant 0 : i32
    %c0_i32_0 = arith.constant 0 : i32
    %c0_i32_1 = arith.constant 0 : i32
    return %c0_i32, %c0_i32_0 : i32, i32
  }
  func.func @transform_10(%arg0: i32, %arg1: i32) -> (i32, i32) {
    %c0_i32 = arith.constant 0 : i32
    %c0_i32_0 = arith.constant 0 : i32
    %c0_i32_1 = arith.constant 0 : i32
    return %c0_i32, %c0_i32_0 : i32, i32
  }
  func.func @transform_11(%arg0: i32, %arg1: i32) -> (i32, i32) {
    %c0_i32 = arith.constant 0 : i32
    %c0_i32_0 = arith.constant 0 : i32
    %c0_i32_1 = arith.constant 0 : i32
    return %c0_i32, %c0_i32_0 : i32, i32
  }
  func.func @transform_12(%arg0: i32, %arg1: i32) -> (i32, i32) {
    %c0_i32 = arith.constant 0 : i32
    %c0_i32_0 = arith.constant 0 : i32
    %c0_i32_1 = arith.constant 0 : i32
    return %c0_i32, %c0_i32_0 : i32, i32
  }
  func.func @transform_13(%arg0: i32, %arg1: i32) -> (i32, i32) {
    %c0_i32 = arith.constant 0 : i32
    %c0_i32_0 = arith.constant 0 : i32
    %c0_i32_1 = arith.constant 0 : i32
    return %c0_i32, %c0_i32_0 : i32, i32
  }
  func.func @transform_14(%arg0: i32, %arg1: i32) -> (i32, i32) {
    %c0_i32 = arith.constant 0 : i32
    %c0_i32_0 = arith.constant 0 : i32
    %c0_i32_1 = arith.constant 0 : i32
    return %c0_i32, %c0_i32_0 : i32, i32
  }
  func.func @transform_15(%arg0: i32, %arg1: i32) -> (i32, i32, i32) {
    %c0_i32 = arith.constant 0 : i32
    %c0_i32_0 = arith.constant 0 : i32
    return %arg0, %arg1, %c0_i32 : i32, i32, i32
  }
}

</mosaic_0001>

<llo_original>
// kernel: tpu_custom_call.1
$region0: #{tpu_custom_call.1}
  #allocation0 [shape = 'u32[]', space=smem, size = 0x4, offset = 0x4, fixed_abs, tag = 'smem constant byte address 0x4 - core index']
  #allocation1 [shape = 'u32[144,128]{1,0:T(1,128)}', space=vmem, size = 0x12000, scoped, tag = 'internal scratch']
  #allocation2 [shape = 'f32[4,8,16]{2,1,0:T(8,128)}', space=vmem, size = 0x4000, scoped, tag = 'scratch operand']
  #allocation3 [shape = 'f32[4,16,8]{2,1,0:T(8,128)}', space=vmem, size = 0x8000, scoped, tag = 'scratch operand']
  %s0 = inlined_call_operand.vmem [shape: f32[2,32,8], index: 0, kind: input, shape index: {}]
  %s1 = inlined_call_operand.vmem [shape: f32[2,32,8], index: 1, kind: input, shape index: {}]
  %s2 = inlined_call_operand.vmem [shape: f32[2,8,32], index: 2, kind: input, shape index: {}]
  %s3 = inlined_call_operand.vmem [shape: f32[2,8,1], index: 3, kind: input, shape index: {}]
  %s4 = inlined_call_operand.vmem [shape: f32[64,32], index: 4, kind: input, shape index: {}]
  %s5 = inlined_call_operand.vmem [shape: f32[128,32], index: 5, kind: input, shape index: {}]
  %s6 = inlined_call_operand.vmem [shape: f32[32,64], index: 6, kind: input, shape index: {}]
  %s7 = inlined_call_operand.vmem [shape: f32[1,32], index: 7, kind: input, shape index: {}]
  %s8 = inlined_call_operand.vmem [shape: f32[1,32], index: 8, kind: input, shape index: {}]
  %s9 = inlined_call_operand.vmem [shape: f32[32,64], index: 9, kind: input, shape index: {}]
  %s10 = inlined_call_operand.vmem [shape: f32[1,64], index: 10, kind: input, shape index: {}]
  %s11 = inlined_call_operand.vmem [shape: f32[64,32], index: 11, kind: input, shape index: {}]
  %s12 = inlined_call_operand.vmem [shape: f32[1,32], index: 12, kind: input, shape index: {}]
  %s13 = inlined_call_operand.vmem [shape: f32[1,32], index: 13, kind: input, shape index: {}]
  %s14 = inlined_call_operand.vmem [shape: f32[1,32], index: 14, kind: input, shape index: {}]
  %s15 = inlined_call_operand.hbm [shape: f32[2,8,32], index: 15, kind: output, shape index: {}]
  %s16 = sld [smem:[#allocation0]]
  $region97: #{tpu_custom_call.1} parent=0
    _
  %s18 = ssub.s32 1, %s16
  %s19 = scalar_select 0, %s18, %s16
  $region1: #{tpu_custom_call.1} parent=0
    #allocation4 [shape = 'u8[8192]{0}', space=vmem, size = 0x2000, scoped, tag = 'output window, operand 0']
    #allocation5 [shape = 's32[2]{0}', space=sflag, size = 0x8, scoped, tag = 'scoped memory for tpu_custom_call.1']
    %20 = vsyncpa [#allocation5], 0
    %s21 = scalar_lea.sflag [#allocation5], 1
    %22 = vsyncpa %s21, 0
    loop: start=0, step=1, limit=4
    $region2: #{tpu_custom_call.1} parent=1 // loop_pre_header
      _
    $region3: #{tpu_custom_call.1} parent=1 // loop_header
      %s24 = sphi 0, %s28
      %p25 = scmp.ge.s32.totalorder %s24, 4
      %s31 = sphi 0, %s43
      %s32 = sphi 0, %s39
      %s33 = sphi 0, %s31
      %s34 = sphi 0, %s32
      %s35 = sphi 0, %s33
      %s36 = sphi 0, %s34
      %s46 = sphi 0, %s48
      %s49 = sphi 0, %s46
      %s50 = sphi 0, %s49
      %s66 = sphi 0, %s50
      %s74 = sphi 0, %s76
      %s77 = sphi 0, %s74
      %s78 = sphi 0, %s77
      %s94 = sphi 0, %s78
      %s102 = sphi 0, %s104
      %s105 = sphi 0, %s102
      %s106 = sphi 0, %s105
      %s122 = sphi 0, %s106
      %s128 = sphi 0, %s130
      %s131 = sphi 0, %s128
      %s132 = sphi 0, %s131
      %s148 = sphi 0, %s132
      %s152 = sphi 0, %s152
      %s154 = sphi 0, %s152
      %s155 = sphi 0, %s154
      %s169 = sphi 0, %s155
      %s173 = sphi 0, %s173
      %s175 = sphi 0, %s173
      %s176 = sphi 0, %s175
      %s190 = sphi 0, %s176
      %s194 = sphi 0, %s194
      %s196 = sphi 0, %s194
      %s197 = sphi 0, %s196
      %s211 = sphi 0, %s197
      %s215 = sphi 0, %s215
      %s217 = sphi 0, %s215
      %s218 = sphi 0, %s217
      %s232 = sphi 0, %s218
      %s236 = sphi 0, %s236
      %s238 = sphi 0, %s236
      %s239 = sphi 0, %s238
      %s253 = sphi 0, %s239
      %s257 = sphi 0, %s257
      %s259 = sphi 0, %s257
      %s260 = sphi 0, %s259
      %s274 = sphi 0, %s260
      %s278 = sphi 0, %s278
      %s280 = sphi 0, %s278
      %s281 = sphi 0, %s280
      %s295 = sphi 0, %s281
      %s299 = sphi 0, %s299
      %s301 = sphi 0, %s299
      %s302 = sphi 0, %s301
      %s316 = sphi 0, %s302
      %s320 = sphi 0, %s320
      %s322 = sphi 0, %s320
      %s323 = sphi 0, %s322
      %s337 = sphi 0, %s323
      %s341 = sphi 0, %s341
      %s343 = sphi 0, %s341
      %s344 = sphi 0, %s343
      %s358 = sphi 0, %s344
      %s362 = sphi 0, %s362
      %s364 = sphi 0, %s362
      %s365 = sphi 0, %s364
      %s379 = sphi 0, %s365
      %s387 = sphi 0, %s389
      %s390 = sphi 0, %s387
      %s391 = sphi 0, %s390
      %s407 = sphi 0, %s391
    $region4: #{tpu_custom_call.1} parent=1 // loop_header_branch
      %27 = sbr.rel (%p25) target = $region8
    $region5: #{tpu_custom_call.1} parent=1 // loop_body
      %s29 = ssub.s32 %s24, 1
      %s30 = ssub.s32 %s24, 2
      %s37 = sadd.s32 1, %s32
      %p38 = scmp.ge.s32.totalorder %s37, 1
      %s39 = scalar_select %p38, 0, %s37
      %s40 = sadd.s32 1, %s31
      %s41 = scalar_select %p38, %s40, %s31
      %p42 = scmp.ge.s32.totalorder %s41, 2
      %s43 = scalar_select %p42, 0, %s41
      %s44 = ssub.s32 %s31, %s43
      %p45 = scmp.eq.s32.totalorder %s44, 0
      %s47 = sadd.s32 %s46, 1
      %s48 = scalar_select %p45, %s46, %s47
      %p51 = pneg %p45
      %p52 = scmp.eq.s32.totalorder %s24, 1
      %p53 = por %p51, %p52
      %p54 = scmp.ne.s32.totalorder %s46, %s49
      %p55 = scmp.eq.s32.totalorder %s24, 0
      %p56 = por %p54, %p55
      %p57 = scmp.ne.s32.totalorder %s46, %s49
      %p58 = scmp.eq.s32.totalorder %s29, 1
      %p59 = por %p57, %p58
      %p60 = scmp.ne.s32.totalorder %s49, %s50
      %p61 = scmp.eq.s32.totalorder %s29, 0
      %p62 = por %p60, %p61
      %p63 = scmp.ne.s32.totalorder %s49, %s50
      %p64 = scmp.eq.s32.totalorder %s30, 1
      %p65 = por %p63, %p64
      %p67 = scmp.ne.s32.totalorder %s50, %s66
      %p68 = scmp.eq.s32.totalorder %s30, 0
      %p69 = por %p67, %p68
      %s70 = ssub.s32 %s31, %s43
      %s71 = ssub.s32 %s32, %s39
      %s72 = sor.u32 %s70, %s71
      %p73 = scmp.eq.s32.totalorder %s72, 0
      %s75 = sadd.s32 %s74, 1
      %s76 = scalar_select %p73, %s74, %s75
      %p79 = pneg %p73
      %p80 = scmp.eq.s32.totalorder %s24, 1
      %p81 = por %p79, %p80
      %p82 = scmp.ne.s32.totalorder %s74, %s77
      %p83 = scmp.eq.s32.totalorder %s24, 0
      %p84 = por %p82, %p83
      %p85 = scmp.ne.s32.totalorder %s74, %s77
      %p86 = scmp.eq.s32.totalorder %s29, 1
      %p87 = por %p85, %p86
      %p88 = scmp.ne.s32.totalorder %s77, %s78
      %p89 = scmp.eq.s32.totalorder %s29, 0
      %p90 = por %p88, %p89
      %p91 = scmp.ne.s32.totalorder %s77, %s78
      %p92 = scmp.eq.s32.totalorder %s30, 1
      %p93 = por %p91, %p92
      %p95 = scmp.ne.s32.totalorder %s78, %s94
      %p96 = scmp.eq.s32.totalorder %s30, 0
      %p97 = por %p95, %p96
      %s98 = ssub.s32 %s31, %s43
      %s99 = ssub.s32 %s32, %s39
      %s100 = sor.u32 %s98, %s99
      %p101 = scmp.eq.s32.totalorder %s100, 0
      %s103 = sadd.s32 %s102, 1
      %s104 = scalar_select %p101, %s102, %s103
      %p107 = pneg %p101
      %p108 = scmp.eq.s32.totalorder %s24, 1
      %p109 = por %p107, %p108
      %p110 = scmp.ne.s32.totalorder %s102, %s105
      %p111 = scmp.eq.s32.totalorder %s24, 0
      %p112 = por %p110, %p111
      %p113 = scmp.ne.s32.totalorder %s102, %s105
      %p114 = scmp.eq.s32.totalorder %s29, 1
      %p115 = por %p113, %p114
      %p116 = scmp.ne.s32.totalorder %s105, %s106
      %p117 = scmp.eq.s32.totalorder %s29, 0
      %p118 = por %p116, %p117
      %p119 = scmp.ne.s32.totalorder %s105, %s106
      %p120 = scmp.eq.s32.totalorder %s30, 1
      %p121 = por %p119, %p120
      %p123 = scmp.ne.s32.totalorder %s106, %s122
      %p124 = scmp.eq.s32.totalorder %s30, 0
      %p125 = por %p123, %p124
      %s126 = ssub.s32 %s31, %s43
      %p127 = scmp.eq.s32.totalorder %s126, 0
      %s129 = sadd.s32 %s128, 1
      %s130 = scalar_select %p127, %s128, %s129
      %p133 = pneg %p127
      %p134 = scmp.eq.s32.totalorder %s24, 1
      %p135 = por %p133, %p134
      %p136 = scmp.ne.s32.totalorder %s128, %s131
      %p137 = scmp.eq.s32.totalorder %s24, 0
      %p138 = por %p136, %p137
      %p139 = scmp.ne.s32.totalorder %s128, %s131
      %p140 = scmp.eq.s32.totalorder %s29, 1
      %p141 = por %p139, %p140
      %p142 = scmp.ne.s32.totalorder %s131, %s132
      %p143 = scmp.eq.s32.totalorder %s29, 0
      %p144 = por %p142, %p143
      %p145 = scmp.ne.s32.totalorder %s131, %s132
      %p146 = scmp.eq.s32.totalorder %s30, 1
      %p147 = por %p145, %p146
      %p149 = scmp.ne.s32.totalorder %s132, %s148
      %p150 = scmp.eq.s32.totalorder %s30, 0
      %p151 = por %p149, %p150
      %s153 = sadd.s32 %s152, 1
      %p156 = scmp.eq.s32.totalorder %s24, 1
      %p157 = scmp.ne.s32.totalorder %s152, %s154
      %p158 = scmp.eq.s32.totalorder %s24, 0
      %p159 = por %p157, %p158
      %p160 = scmp.ne.s32.totalorder %s152, %s154
      %p161 = scmp.eq.s32.totalorder %s29, 1
      %p162 = por %p160, %p161
      %p163 = scmp.ne.s32.totalorder %s154, %s155
      %p164 = scmp.eq.s32.totalorder %s29, 0
      %p165 = por %p163, %p164
      %p166 = scmp.ne.s32.totalorder %s154, %s155
      %p167 = scmp.eq.s32.totalorder %s30, 1
      %p168 = por %p166, %p167
      %p170 = scmp.ne.s32.totalorder %s155, %s169
      %p171 = scmp.eq.s32.totalorder %s30, 0
      %p172 = por %p170, %p171
      %s174 = sadd.s32 %s173, 1
      %p177 = scmp.eq.s32.totalorder %s24, 1
      %p178 = scmp.ne.s32.totalorder %s173, %s175
      %p179 = scmp.eq.s32.totalorder %s24, 0
      %p180 = por %p178, %p179
      %p181 = scmp.ne.s32.totalorder %s173, %s175
      %p182 = scmp.eq.s32.totalorder %s29, 1
      %p183 = por %p181, %p182
      %p184 = scmp.ne.s32.totalorder %s175, %s176
      %p185 = scmp.eq.s32.totalorder %s29, 0
      %p186 = por %p184, %p185
      %p187 = scmp.ne.s32.totalorder %s175, %s176
      %p188 = scmp.eq.s32.totalorder %s30, 1
      %p189 = por %p187, %p188
      %p191 = scmp.ne.s32.totalorder %s176, %s190
      %p192 = scmp.eq.s32.totalorder %s30, 0
      %p193 = por %p191, %p192
      %s195 = sadd.s32 %s194, 1
      %p198 = scmp.eq.s32.totalorder %s24, 1
      %p199 = scmp.ne.s32.totalorder %s194, %s196
      %p200 = scmp.eq.s32.totalorder %s24, 0
      %p201 = por %p199, %p200
      %p202 = scmp.ne.s32.totalorder %s194, %s196
      %p203 = scmp.eq.s32.totalorder %s29, 1
      %p204 = por %p202, %p203
      %p205 = scmp.ne.s32.totalorder %s196, %s197
      %p206 = scmp.eq.s32.totalorder %s29, 0
      %p207 = por %p205, %p206
      %p208 = scmp.ne.s32.totalorder %s196, %s197
      %p209 = scmp.eq.s32.totalorder %s30, 1
      %p210 = por %p208, %p209
      %p212 = scmp.ne.s32.totalorder %s197, %s211
      %p213 = scmp.eq.s32.totalorder %s30, 0
      %p214 = por %p212, %p213
      %s216 = sadd.s32 %s215, 1
      %p219 = scmp.eq.s32.totalorder %s24, 1
      %p220 = scmp.ne.s32.totalorder %s215, %s217
      %p221 = scmp.eq.s32.totalorder %s24, 0
      %p222 = por %p220, %p221
      %p223 = scmp.ne.s32.totalorder %s215, %s217
      %p224 = scmp.eq.s32.totalorder %s29, 1
      %p225 = por %p223, %p224
      %p226 = scmp.ne.s32.totalorder %s217, %s218
      %p227 = scmp.eq.s32.totalorder %s29, 0
      %p228 = por %p226, %p227
      %p229 = scmp.ne.s32.totalorder %s217, %s218
      %p230 = scmp.eq.s32.totalorder %s30, 1
      %p231 = por %p229, %p230
      %p233 = scmp.ne.s32.totalorder %s218, %s232
      %p234 = scmp.eq.s32.totalorder %s30, 0
      %p235 = por %p233, %p234
      %s237 = sadd.s32 %s236, 1
      %p240 = scmp.eq.s32.totalorder %s24, 1
      %p241 = scmp.ne.s32.totalorder %s236, %s238
      %p242 = scmp.eq.s32.totalorder %s24, 0
      %p243 = por %p241, %p242
      %p244 = scmp.ne.s32.totalorder %s236, %s238
      %p245 = scmp.eq.s32.totalorder %s29, 1
      %p246 = por %p244, %p245
      %p247 = scmp.ne.s32.totalorder %s238, %s239
      %p248 = scmp.eq.s32.totalorder %s29, 0
      %p249 = por %p247, %p248
      %p250 = scmp.ne.s32.totalorder %s238, %s239
      %p251 = scmp.eq.s32.totalorder %s30, 1
      %p252 = por %p250, %p251
      %p254 = scmp.ne.s32.totalorder %s239, %s253
      %p255 = scmp.eq.s32.totalorder %s30, 0
      %p256 = por %p254, %p255
      %s258 = sadd.s32 %s257, 1
      %p261 = scmp.eq.s32.totalorder %s24, 1
      %p262 = scmp.ne.s32.totalorder %s257, %s259
      %p263 = scmp.eq.s32.totalorder %s24, 0
      %p264 = por %p262, %p263
      %p265 = scmp.ne.s32.totalorder %s257, %s259
      %p266 = scmp.eq.s32.totalorder %s29, 1
      %p267 = por %p265, %p266
      %p268 = scmp.ne.s32.totalorder %s259, %s260
      %p269 = scmp.eq.s32.totalorder %s29, 0
      %p270 = por %p268, %p269
      %p271 = scmp.ne.s32.totalorder %s259, %s260
      %p272 = scmp.eq.s32.totalorder %s30, 1
      %p273 = por %p271, %p272
      %p275 = scmp.ne.s32.totalorder %s260, %s274
      %p276 = scmp.eq.s32.totalorder %s30, 0
      %p277 = por %p275, %p276
      %s279 = sadd.s32 %s278, 1
      %p282 = scmp.eq.s32.totalorder %s24, 1
      %p283 = scmp.ne.s32.totalorder %s278, %s280
      %p284 = scmp.eq.s32.totalorder %s24, 0
      %p285 = por %p283, %p284
      %p286 = scmp.ne.s32.totalorder %s278, %s280
      %p287 = scmp.eq.s32.totalorder %s29, 1
      %p288 = por %p286, %p287
      %p289 = scmp.ne.s32.totalorder %s280, %s281
      %p290 = scmp.eq.s32.totalorder %s29, 0
      %p291 = por %p289, %p290
      %p292 = scmp.ne.s32.totalorder %s280, %s281
      %p293 = scmp.eq.s32.totalorder %s30, 1
      %p294 = por %p292, %p293
      %p296 = scmp.ne.s32.totalorder %s281, %s295
      %p297 = scmp.eq.s32.totalorder %s30, 0
      %p298 = por %p296, %p297
      %s300 = sadd.s32 %s299, 1
      %p303 = scmp.eq.s32.totalorder %s24, 1
      %p304 = scmp.ne.s32.totalorder %s299, %s301
      %p305 = scmp.eq.s32.totalorder %s24, 0
      %p306 = por %p304, %p305
      %p307 = scmp.ne.s32.totalorder %s299, %s301
      %p308 = scmp.eq.s32.totalorder %s29, 1
      %p309 = por %p307, %p308
      %p310 = scmp.ne.s32.totalorder %s301, %s302
      %p311 = scmp.eq.s32.totalorder %s29, 0
      %p312 = por %p310, %p311
      %p313 = scmp.ne.s32.totalorder %s301, %s302
      %p314 = scmp.eq.s32.totalorder %s30, 1
      %p315 = por %p313, %p314
      %p317 = scmp.ne.s32.totalorder %s302, %s316
      %p318 = scmp.eq.s32.totalorder %s30, 0
      %p319 = por %p317, %p318
      %s321 = sadd.s32 %s320, 1
      %p324 = scmp.eq.s32.totalorder %s24, 1
      %p325 = scmp.ne.s32.totalorder %s320, %s322
      %p326 = scmp.eq.s32.totalorder %s24, 0
      %p327 = por %p325, %p326
      %p328 = scmp.ne.s32.totalorder %s320, %s322
      %p329 = scmp.eq.s32.totalorder %s29, 1
      %p330 = por %p328, %p329
      %p331 = scmp.ne.s32.totalorder %s322, %s323
      %p332 = scmp.eq.s32.totalorder %s29, 0
      %p333 = por %p331, %p332
      %p334 = scmp.ne.s32.totalorder %s322, %s323
      %p335 = scmp.eq.s32.totalorder %s30, 1
      %p336 = por %p334, %p335
      %p338 = scmp.ne.s32.totalorder %s323, %s337
      %p339 = scmp.eq.s32.totalorder %s30, 0
      %p340 = por %p338, %p339
      %s342 = sadd.s32 %s341, 1
      %p345 = scmp.eq.s32.totalorder %s24, 1
      %p346 = scmp.ne.s32.totalorder %s341, %s343
      %p347 = scmp.eq.s32.totalorder %s24, 0
      %p348 = por %p346, %p347
      %p349 = scmp.ne.s32.totalorder %s341, %s343
      %p350 = scmp.eq.s32.totalorder %s29, 1
      %p351 = por %p349, %p350
      %p352 = scmp.ne.s32.totalorder %s343, %s344
      %p353 = scmp.eq.s32.totalorder %s29, 0
      %p354 = por %p352, %p353
      %p355 = scmp.ne.s32.totalorder %s343, %s344
      %p356 = scmp.eq.s32.totalorder %s30, 1
      %p357 = por %p355, %p356
      %p359 = scmp.ne.s32.totalorder %s344, %s358
      %p360 = scmp.eq.s32.totalorder %s30, 0
      %p361 = por %p359, %p360
      %s363 = sadd.s32 %s362, 1
      %p366 = scmp.eq.s32.totalorder %s24, 1
      %p367 = scmp.ne.s32.totalorder %s362, %s364
      %p368 = scmp.eq.s32.totalorder %s24, 0
      %p369 = por %p367, %p368
      %p370 = scmp.ne.s32.totalorder %s362, %s364
      %p371 = scmp.eq.s32.totalorder %s29, 1
      %p372 = por %p370, %p371
      %p373 = scmp.ne.s32.totalorder %s364, %s365
      %p374 = scmp.eq.s32.totalorder %s29, 0
      %p375 = por %p373, %p374
      %p376 = scmp.ne.s32.totalorder %s364, %s365
      %p377 = scmp.eq.s32.totalorder %s30, 1
      %p378 = por %p376, %p377
      %p380 = scmp.ne.s32.totalorder %s365, %s379
      %p381 = scmp.eq.s32.totalorder %s30, 0
      %p382 = por %p380, %p381
      %s383 = ssub.s32 %s31, %s43
      %s384 = ssub.s32 %s32, %s39
      %s385 = sor.u32 %s383, %s384
      %p386 = scmp.eq.s32.totalorder %s385, 0
      %s388 = sadd.s32 %s387, 1
      %s389 = scalar_select %p386, %s387, %s388
      %p392 = pneg %p386
      %p393 = scmp.eq.s32.totalorder %s24, 1
      %p394 = por %p392, %p393
      %p395 = scmp.ne.s32.totalorder %s387, %s390
      %p396 = scmp.eq.s32.totalorder %s24, 0
      %p397 = por %p395, %p396
      %p398 = scmp.ne.s32.totalorder %s387, %s390
      %p399 = scmp.eq.s32.totalorder %s29, 1
      %p400 = por %p398, %p399
      %p401 = scmp.ne.s32.totalorder %s390, %s391
      %p402 = scmp.eq.s32.totalorder %s29, 0
      %p403 = por %p401, %p402
      %p404 = scmp.ne.s32.totalorder %s390, %s391
      %p405 = scmp.eq.s32.totalorder %s30, 1
      %p406 = por %p404, %p405
      %p408 = scmp.ne.s32.totalorder %s391, %s407
      %p409 = scmp.eq.s32.totalorder %s30, 0
      %p410 = por %p408, %p409
      %p411 = scmp.le.s32.totalorder 1, %s24
      %p412 = scmp.lt.s32.totalorder %s24, 3
      %p413 = pnand %p411, %p412
      %p414 = pneg %p413
      // Predicated region
      $region9: #{tpu_custom_call.1} parent=5 // pred_check
        _
      $region10: #{tpu_custom_call.1} parent=5 // pred_check_branch
        %416 = sbr.rel (%p413) target = $region12
      $region11: #{tpu_custom_call.1} parent=5 // pred_region
        %s417 = ssub.s32 %s24, 1
        // Predicated region
        $region13: #{tpu_custom_call.1} parent=11 // pred_check
          %p418 = pneg %p165
        $region14: #{tpu_custom_call.1} parent=11 // pred_check_branch
          %420 = sbr.rel (%p418) target = $region16
        $region15: #{tpu_custom_call.1} parent=11 // pred_region
          _
        $region16: #{tpu_custom_call.1} parent=11 // pred_fallthru
          _
        // Predicated region
        $region17: #{tpu_custom_call.1} parent=11 // pred_check
          %p421 = pneg %p186
        $region18: #{tpu_custom_call.1} parent=11 // pred_check_branch
          %423 = sbr.rel (%p421) target = $region20
        $region19: #{tpu_custom_call.1} parent=11 // pred_region
          _
        $region20: #{tpu_custom_call.1} parent=11 // pred_fallthru
          _
        // Predicated region
        $region21: #{tpu_custom_call.1} parent=11 // pred_check
          %p424 = pneg %p207
        $region22: #{tpu_custom_call.1} parent=11 // pred_check_branch
          %426 = sbr.rel (%p424) target = $region24
        $region23: #{tpu_custom_call.1} parent=11 // pred_region
          _
        $region24: #{tpu_custom_call.1} parent=11 // pred_fallthru
          _
        // Predicated region
        $region25: #{tpu_custom_call.1} parent=11 // pred_check
          %p427 = pneg %p228
        $region26: #{tpu_custom_call.1} parent=11 // pred_check_branch
          %429 = sbr.rel (%p427) target = $region28
        $region27: #{tpu_custom_call.1} parent=11 // pred_region
          _
        $region28: #{tpu_custom_call.1} parent=11 // pred_fallthru
          _
        // Predicated region
        $region29: #{tpu_custom_call.1} parent=11 // pred_check
          %p430 = pneg %p249
        $region30: #{tpu_custom_call.1} parent=11 // pred_check_branch
          %432 = sbr.rel (%p430) target = $region32
        $region31: #{tpu_custom_call.1} parent=11 // pred_region
          _
        $region32: #{tpu_custom_call.1} parent=11 // pred_fallthru
          _
        // Predicated region
        $region33: #{tpu_custom_call.1} parent=11 // pred_check
          %p433 = pneg %p270
        $region34: #{tpu_custom_call.1} parent=11 // pred_check_branch
          %435 = sbr.rel (%p433) target = $region36
        $region35: #{tpu_custom_call.1} parent=11 // pred_region
          _
        $region36: #{tpu_custom_call.1} parent=11 // pred_fallthru
          _
        // Predicated region
        $region37: #{tpu_custom_call.1} parent=11 // pred_check
          %p436 = pneg %p291
        $region38: #{tpu_custom_call.1} parent=11 // pred_check_branch
          %438 = sbr.rel (%p436) target = $region40
        $region39: #{tpu_custom_call.1} parent=11 // pred_region
          _
        $region40: #{tpu_custom_call.1} parent=11 // pred_fallthru
          _
        // Predicated region
        $region41: #{tpu_custom_call.1} parent=11 // pred_check
          %p439 = pneg %p312
        $region42: #{tpu_custom_call.1} parent=11 // pred_check_branch
          %441 = sbr.rel (%p439) target = $region44
        $region43: #{tpu_custom_call.1} parent=11 // pred_region
          _
        $region44: #{tpu_custom_call.1} parent=11 // pred_fallthru
          _
        // Predicated region
        $region45: #{tpu_custom_call.1} parent=11 // pred_check
          %p442 = pneg %p333
        $region46: #{tpu_custom_call.1} parent=11 // pred_check_branch
          %444 = sbr.rel (%p442) target = $region48
        $region47: #{tpu_custom_call.1} parent=11 // pred_region
          _
        $region48: #{tpu_custom_call.1} parent=11 // pred_fallthru
          _
        // Predicated region
        $region49: #{tpu_custom_call.1} parent=11 // pred_check
          %p445 = pneg %p354
        $region50: #{tpu_custom_call.1} parent=11 // pred_check_branch
          %447 = sbr.rel (%p445) target = $region52
        $region51: #{tpu_custom_call.1} parent=11 // pred_region
          _
        $region52: #{tpu_custom_call.1} parent=11 // pred_fallthru
          _
        // Predicated region
        $region53: #{tpu_custom_call.1} parent=11 // pred_check
          %p448 = pneg %p375
        $region54: #{tpu_custom_call.1} parent=11 // pred_check_branch
          %450 = sbr.rel (%p448) target = $region56
        $region55: #{tpu_custom_call.1} parent=11 // pred_region
          _
        $region56: #{tpu_custom_call.1} parent=11 // pred_fallthru
          _
      $region12: #{tpu_custom_call.1} parent=5 // pred_fallthru
        _
      %p451 = scmp.lt.s32.totalorder %s24, 2
      // Predicated region
      $region57: #{tpu_custom_call.1} parent=5 // pred_check
        %p452 = pneg %p451
      $region58: #{tpu_custom_call.1} parent=5 // pred_check_branch
        %454 = sbr.rel (%p452) target = $region60
      $region59: #{tpu_custom_call.1} parent=5 // pred_region
        // Predicated region
        $region61: #{tpu_custom_call.1} parent=59 // pred_check
          %p455 = pneg %p56
        $region62: #{tpu_custom_call.1} parent=59 // pred_check_branch
          %457 = sbr.rel (%p455) target = $region64
        $region63: #{tpu_custom_call.1} parent=59 // pred_region
          %p458 = scmp.lt.s32.totalorder %s31, 1
          %s459 = scalar_select %p458, %s31, 1
          %s460 = smul.addr %s459, 4
          %s461 = smul.addr %s460, 8
          %s462 = scalar_lea.vmem %s0, %s461
        $region64: #{tpu_custom_call.1} parent=59 // pred_fallthru
          _
        // Predicated region
        $region65: #{tpu_custom_call.1} parent=59 // pred_check
          %p463 = pneg %p84
        $region66: #{tpu_custom_call.1} parent=59 // pred_check_branch
          %465 = sbr.rel (%p463) target = $region68
        $region67: #{tpu_custom_call.1} parent=59 // pred_region
          %p466 = scmp.lt.s32.totalorder %s31, 1
          %s467 = scalar_select %p466, %s31, 1
          %p468 = scmp.lt.s32.totalorder %s32, 0
          %s469 = scalar_select %p468, %s32, 0
          %s470 = smul.addr %s467, 4
          %s471 = sadd.s32 %s469, %s470
          %s472 = smul.addr %s471, 8
          %s473 = scalar_lea.vmem %s1, %s472
        $region68: #{tpu_custom_call.1} parent=59 // pred_fallthru
          _
        // Predicated region
        $region69: #{tpu_custom_call.1} parent=59 // pred_check
          %p474 = pneg %p112
        $region70: #{tpu_custom_call.1} parent=59 // pred_check_branch
          %476 = sbr.rel (%p474) target = $region72
        $region71: #{tpu_custom_call.1} parent=59 // pred_region
          %p477 = scmp.lt.s32.totalorder %s31, 1
          %s478 = scalar_select %p477, %s31, 1
          %p479 = scmp.lt.s32.totalorder %s32, 0
          %s480 = scalar_select %p479, %s32, 0
          %s481 = sadd.s32 %s480, %s478
          %s482 = smul.addr %s481, 8
          %s483 = scalar_lea.vmem %s2, %s482
        $region72: #{tpu_custom_call.1} parent=59 // pred_fallthru
          _
        // Predicated region
        $region73: #{tpu_custom_call.1} parent=59 // pred_check
          %p484 = pneg %p138
        $region74: #{tpu_custom_call.1} parent=59 // pred_check_branch
          %486 = sbr.rel (%p484) target = $region76
        $region75: #{tpu_custom_call.1} parent=59 // pred_region
          %p487 = scmp.lt.s32.totalorder %s31, 1
          %s488 = scalar_select %p487, %s31, 1
          %s489 = smul.addr %s488, 8
          %s490 = scalar_lea.vmem %s3, %s489
        $region76: #{tpu_custom_call.1} parent=59 // pred_fallthru
          _
      $region60: #{tpu_custom_call.1} parent=5 // pred_fallthru
        _
      %p491 = scmp.le.s32.totalorder 1, %s24
      %p492 = scmp.lt.s32.totalorder %s24, 3
      %p493 = pnand %p491, %p492
      %p494 = pneg %p493
      // Predicated region
      $region77: #{tpu_custom_call.1} parent=5 // pred_check
        _
      $region78: #{tpu_custom_call.1} parent=5 // pred_check_branch
        %496 = sbr.rel (%p493) target = $region80
      $region79: #{tpu_custom_call.1} parent=5 // pred_region
        %s497 = ssub.s32 %s24, 1
        %p498 = scmp.lt.s32.totalorder %s33, 1
        %s499 = scalar_select %p498, %s33, 1
        %s500 = smul.addr %s499, 4
        %s501 = smul.addr %s500, 8
        %s502 = scalar_lea.vmem %s0, %s501
        %p503 = pneg %p62
        %p504 = pneg %p59
        %p505 = scmp.lt.s32.totalorder %s33, 1
        %s506 = scalar_select %p505, %s33, 1
        %p507 = scmp.lt.s32.totalorder %s34, 0
        %s508 = scalar_select %p507, %s34, 0
        %s509 = smul.addr %s506, 4
        %s510 = sadd.s32 %s508, %s509
        %s511 = smul.addr %s510, 8
        %s512 = scalar_lea.vmem %s1, %s511
        %p513 = pneg %p90
        %p514 = pneg %p87
        %p515 = scmp.lt.s32.totalorder %s33, 1
        %s516 = scalar_select %p515, %s33, 1
        %p517 = scmp.lt.s32.totalorder %s34, 0
        %s518 = scalar_select %p517, %s34, 0
        %s519 = sadd.s32 %s518, %s516
        %s520 = smul.addr %s519, 8
        %s521 = scalar_lea.vmem %s2, %s520
        %p522 = pneg %p118
        %p523 = pneg %p115
        %p524 = scmp.lt.s32.totalorder %s33, 1
        %s525 = scalar_select %p524, %s33, 1
        %s526 = smul.addr %s525, 8
        %s527 = scalar_lea.vmem %s3, %s526
        %p528 = pneg %p144
        %p529 = pneg %p141
        %p530 = pneg %p165
        %p531 = pneg %p162
        %p532 = pneg %p186
        %p533 = pneg %p183
        %p534 = pneg %p207
        %p535 = pneg %p204
        %p536 = pneg %p228
        %p537 = pneg %p225
        %p538 = pneg %p249
        %p539 = pneg %p246
        %p540 = pneg %p270
        %p541 = pneg %p267
        %p542 = pneg %p291
        %p543 = pneg %p288
        %p544 = pneg %p312
        %p545 = pneg %p309
        %p546 = pneg %p333
        %p547 = pneg %p330
        %p548 = pneg %p354
        %p549 = pneg %p351
        %p550 = pneg %p375
        %p551 = pneg %p372
        %p552 = pneg %p403
        %p553 = pneg %p400
        %s554 = sand.u32 %s390, 1
        %s555 = scalar_lea.sflag [#allocation5], %s554
        %s556 = sand.u32 %s390, 1
        %s557 = smul.addr %s556, 8
        %s558 = scalar_lea.vmem [#allocation4], %s557
        %p559 = scmp.lt.s32.totalorder %s33, 1
        %s560 = scalar_select %p559, %s33, 1
        %s561 = smul.addr %s560, 4
        %s562 = smul.addr %s561, 8
        %s563 = scalar_lea.vmem %s0, %s562
        %p564 = scmp.lt.s32.totalorder %s33, 1
        %s565 = scalar_select %p564, %s33, 1
        %p566 = scmp.lt.s32.totalorder %s34, 0
        %s567 = scalar_select %p566, %s34, 0
        %s568 = smul.addr %s565, 4
        %s569 = sadd.s32 %s567, %s568
        %s570 = smul.addr %s569, 8
        %s571 = scalar_lea.vmem %s1, %s570
        %p572 = scmp.lt.s32.totalorder %s33, 1
        %s573 = scalar_select %p572, %s33, 1
        %p574 = scmp.lt.s32.totalorder %s34, 0
        %s575 = scalar_select %p574, %s34, 0
        %s576 = sadd.s32 %s575, %s573
        %s577 = smul.addr %s576, 8
        %s578 = scalar_lea.vmem %s2, %s577
        %p579 = scmp.lt.s32.totalorder %s33, 1
        %s580 = scalar_select %p579, %s33, 1
        %s581 = smul.addr %s580, 8
        %s582 = scalar_lea.vmem %s3, %s581
        %p583 = scmp.eq.s32.totalorder %s34, 0
        // Predicated region
        $region81: #{tpu_custom_call.1} parent=79 // pred_check
          %p584 = pneg %p583
        $region82: #{tpu_custom_call.1} parent=79 // pred_check_branch
          %586 = sbr.rel (%p584) target = $region84
        $region83: #{tpu_custom_call.1} parent=79 // pred_region
          %v587 = vld [vmem:[%s5] sm:$0xff]
          %v588 = vld [vmem:[%s5 + $0x8] sm:$0xff]
          %v589 = vld [vmem:[%s5 + $0x10] sm:$0xff]
          %v590 = vld [vmem:[%s5 + $0x18] sm:$0xff]
          %v591 = vld [vmem:[%s5 + $0x20] sm:$0xff]
          %v592 = vld [vmem:[%s5 + $0x28] sm:$0xff]
          %v593 = vld [vmem:[%s5 + $0x30] sm:$0xff]
          %v594 = vld [vmem:[%s5 + $0x38] sm:$0xff]
          %v595 = vld [vmem:[%s5 + $0x40] sm:$0xff]
          %v596 = vld [vmem:[%s5 + $0x48] sm:$0xff]
          %v597 = vld [vmem:[%s5 + $0x50] sm:$0xff]
          %v598 = vld [vmem:[%s5 + $0x58] sm:$0xff]
          %v599 = vld [vmem:[%s5 + $0x60] sm:$0xff]
          %v600 = vld [vmem:[%s5 + $0x68] sm:$0xff]
          %v601 = vld [vmem:[%s5 + $0x70] sm:$0xff]
          %v602 = vld [vmem:[%s5 + $0x78] sm:$0xff]
          %v603 = vld [vmem:[%s563] sm:$0xff]
          %v604 = vld [vmem:[%s563 + $0x8] sm:$0xff]
          %v605 = vld [vmem:[%s563 + $0x10] sm:$0xff]
          %v606 = vld [vmem:[%s563 + $0x18] sm:$0xff]
          %vm607 = vcmask 261120
          %v609 = vsel %vm607, %v587, 0
          %v612 = vsel %vm607, %v588, 0
          %v615 = vsel %vm607, %v589, 0
          %v618 = vsel %vm607, %v590, 0
          %v621 = vsel %vm607, %v591, 0
          %v624 = vsel %vm607, %v592, 0
          %v627 = vsel %vm607, %v593, 0
          %v630 = vsel %vm607, %v594, 0
          %v633 = vsel %vm607, %v595, 0
          %v636 = vsel %vm607, %v596, 0
          %v639 = vsel %vm607, %v597, 0
          %v642 = vsel %vm607, %v598, 0
          %v645 = vsel %vm607, %v599, 0
          %v648 = vsel %vm607, %v600, 0
          %v651 = vsel %vm607, %v601, 0
          %v654 = vsel %vm607, %v602, 0
          %656 = vmatprep.subr.mxu0 0.0
          %657 = vmatpush1.msra.mxu0 0.0
          %658 = vmatprep.subr.mxu0 0.0
          %659 = vmatpush1.msra.mxu0 0.0
          %660 = vmatprep.subr.mxu0 0.0
          %661 = vmatpush1.msra.mxu0 0.0
          %662 = vmatprep.subr.mxu0 0.0
          %663 = vmatpush1.msra.mxu0 0.0
          %664 = vmatprep.subr.mxu0 0.0
          %665 = vmatpush1.msra.mxu0 0.0
          %666 = vmatprep.subr.mxu0 0.0
          %667 = vmatpush1.msra.mxu0 0.0
          %668 = vmatprep.subr.mxu0 0.0
          %669 = vmatpush1.msra.mxu0 0.0
          %670 = vmatprep.subr.mxu0 0.0
          %671 = vmatpush1.msra.mxu0 0.0
          %672 = vmatprep.subr.mxu0 0.0
          %673 = vmatpush1.msra.mxu0 0.0
          %674 = vmatprep.subr.mxu0 0.0
          %675 = vmatpush1.msra.mxu0 0.0
          %676 = vmatprep.subr.mxu0 0.0
          %677 = vmatpush1.msra.mxu0 0.0
          %678 = vmatprep.subr.mxu0 0.0
          %679 = vmatpush1.msra.mxu0 0.0
          %680 = vmatprep.subr.mxu0 0.0
          %681 = vmatpush1.msra.mxu0 %v606
          %682 = vmatprep.subr.mxu0 0.0
          %683 = vmatpush1.msra.mxu0 %v605
          %684 = vmatprep.subr.mxu0 0.0
          %685 = vmatpush1.msra.mxu0 %v604
          %686 = vmatprep.subr.mxu0 0.0
          %687 = vmatpush1.msra.mxu0 %v603
          %688 = vmatprep.subr.mxu0 0.0
          %689 = vmatpush2.msra.mxu0 0.0
          %690 = vmatprep.subr.mxu0 0.0
          %691 = vmatpush2.msra.mxu0 0.0
          %692 = vmatprep.subr.mxu0 0.0
          %693 = vmatpush2.msra.mxu0 0.0
          %694 = vmatprep.subr.mxu0 0.0
          %695 = vmatpush2.msra.mxu0 0.0
          %696 = vmatprep.subr.mxu0 0.0
          %697 = vmatpush2.msra.mxu0 0.0
          %698 = vmatprep.subr.mxu0 0.0
          %699 = vmatpush2.msra.mxu0 0.0
          %700 = vmatprep.subr.mxu0 0.0
          %701 = vmatpush2.msra.mxu0 0.0
          %702 = vmatprep.subr.mxu0 0.0
          %703 = vmatpush2.msra.mxu0 0.0
          %704 = vmatprep.subr.mxu0 0.0
          %705 = vmatpush2.msra.mxu0 0.0
          %706 = vmatprep.subr.mxu0 0.0
          %707 = vmatpush2.msra.mxu0 0.0
          %708 = vmatprep.subr.mxu0 0.0
          %709 = vmatpush2.msra.mxu0 0.0
          %710 = vmatprep.subr.mxu0 0.0
          %711 = vmatpush2.msra.mxu0 0.0
          %712 = vmatprep.subr.mxu0 0.0
          %713 = vmatpush2.msra.mxu0 0.0
          %714 = vmatprep.subr.mxu0 0.0
          %715 = vmatpush2.msra.mxu0 0.0
          %716 = vmatprep.subr.mxu0 0.0
          %717 = vmatpush2.msra.mxu0 0.0
          %718 = vmatprep.subr.mxu0 0.0
          %719 = vmatpush2.msra.mxu0 0.0
          %720 = vmatprep.mubr.f32.mxu0 0.0
          %721 = vmatmul.mubr.f32.gmra.mxu0 %v609
          %v722 = vpop.f32.mrf.mxu0
          %v723 = vadd.f32 0.0, %v722
          %v724 = vpop.f32.mrf.mxu0
          %725 = vmatprep.mubr.f32.mxu0 0.0
          %726 = vmatmul.mubr.f32.gmra.mxu0 %v612
          %v727 = vpop.f32.mrf.mxu0
          %v728 = vadd.f32 0.0, %v727
          %v729 = vpop.f32.mrf.mxu0
          %730 = vmatprep.mubr.f32.mxu0 0.0
          %731 = vmatmul.mubr.f32.gmra.mxu0 %v615
          %v732 = vpop.f32.mrf.mxu0
          %v733 = vadd.f32 0.0, %v732
          %v734 = vpop.f32.mrf.mxu0
          %735 = vmatprep.mubr.f32.mxu0 0.0
          %736 = vmatmul.mubr.f32.gmra.mxu0 %v618
          %v737 = vpop.f32.mrf.mxu0
          %v738 = vadd.f32 0.0, %v737
          %v739 = vpop.f32.mrf.mxu0
          %740 = vmatprep.mubr.f32.mxu0 0.0
          %741 = vmatmul.mubr.f32.gmra.mxu0 %v621
          %v742 = vpop.f32.mrf.mxu0
          %v743 = vadd.f32 0.0, %v742
          %v744 = vpop.f32.mrf.mxu0
          %745 = vmatprep.mubr.f32.mxu0 0.0
          %746 = vmatmul.mubr.f32.gmra.mxu0 %v624
          %v747 = vpop.f32.mrf.mxu0
          %v748 = vadd.f32 0.0, %v747
          %v749 = vpop.f32.mrf.mxu0
          %750 = vmatprep.mubr.f32.mxu0 0.0
          %751 = vmatmul.mubr.f32.gmra.mxu0 %v627
          %v752 = vpop.f32.mrf.mxu0
          %v753 = vadd.f32 0.0, %v752
          %v754 = vpop.f32.mrf.mxu0
          %755 = vmatprep.mubr.f32.mxu0 0.0
          %756 = vmatmul.mubr.f32.gmra.mxu0 %v630
          %v757 = vpop.f32.mrf.mxu0
          %v758 = vadd.f32 0.0, %v757
          %v759 = vpop.f32.mrf.mxu0
          %760 = vmatprep.mubr.f32.mxu0 0.0
          %761 = vmatmul.mubr.f32.gmra.mxu0 %v633
          %v762 = vpop.f32.mrf.mxu0
          %v763 = vadd.f32 0.0, %v762
          %v764 = vpop.f32.mrf.mxu0
          %765 = vmatprep.mubr.f32.mxu0 0.0
          %766 = vmatmul.mubr.f32.gmra.mxu0 %v636
          %v767 = vpop.f32.mrf.mxu0
          %v768 = vadd.f32 0.0, %v767
          %v769 = vpop.f32.mrf.mxu0
          %770 = vmatprep.mubr.f32.mxu0 0.0
          %771 = vmatmul.mubr.f32.gmra.mxu0 %v639
          %v772 = vpop.f32.mrf.mxu0
          %v773 = vadd.f32 0.0, %v772
          %v774 = vpop.f32.mrf.mxu0
          %775 = vmatprep.mubr.f32.mxu0 0.0
          %776 = vmatmul.mubr.f32.gmra.mxu0 %v642
          %v777 = vpop.f32.mrf.mxu0
          %v778 = vadd.f32 0.0, %v777
          %v779 = vpop.f32.mrf.mxu0
          %780 = vmatprep.mubr.f32.mxu0 0.0
          %781 = vmatmul.mubr.f32.gmra.mxu0 %v645
          %v782 = vpop.f32.mrf.mxu0
          %v783 = vadd.f32 0.0, %v782
          %v784 = vpop.f32.mrf.mxu0
          %785 = vmatprep.mubr.f32.mxu0 0.0
          %786 = vmatmul.mubr.f32.gmra.mxu0 %v648
          %v787 = vpop.f32.mrf.mxu0
          %v788 = vadd.f32 0.0, %v787
          %v789 = vpop.f32.mrf.mxu0
          %790 = vmatprep.mubr.f32.mxu0 0.0
          %791 = vmatmul.mubr.f32.gmra.mxu0 %v651
          %v792 = vpop.f32.mrf.mxu0
          %v793 = vadd.f32 0.0, %v792
          %v794 = vpop.f32.mrf.mxu0
          %795 = vmatprep.mubr.f32.mxu0 0.0
          %796 = vmatmul.mubr.f32.gmra.mxu0 %v654
          %v797 = vpop.f32.mrf.mxu0
          %v798 = vadd.f32 0.0, %v797
          %v799 = vpop.f32.mrf.mxu0
          %800 = vdwg.mxu0
          %vm801 = vcmask 64512
          %802 = vst.msk [vmem:[#allocation3] sm:$0xff] %vm801, %v763
          %803 = vst.msk [vmem:[#allocation3 + $0x8] sm:$0xff] %vm801, %v768
          %804 = vst.msk [vmem:[#allocation3 + $0x10] sm:$0xff] %vm801, %v773
          %805 = vst.msk [vmem:[#allocation3 + $0x18] sm:$0xff] %vm801, %v778
          %806 = vst.msk [vmem:[#allocation3 + $0x20] sm:$0xff] %vm801, %v783
          %807 = vst.msk [vmem:[#allocation3 + $0x28] sm:$0xff] %vm801, %v788
          %808 = vst.msk [vmem:[#allocation3 + $0x30] sm:$0xff] %vm801, %v793
          %809 = vst.msk [vmem:[#allocation3 + $0x38] sm:$0xff] %vm801, %v798
          %810 = vxpose.xlu0.b32.start [1/16] %v723, 128
          %811 = vxpose.xlu0.b32.cont [2/16] %v728, 128
          %812 = vxpose.xlu0.b32.cont [3/16] 0.0, 128
          %813 = vxpose.xlu0.b32.cont [4/16] 0.0, 128
          %814 = vxpose.xlu0.b32.cont [5/16] 0.0, 128
          %815 = vxpose.xlu0.b32.cont [6/16] 0.0, 128
          %816 = vxpose.xlu0.b32.cont [7/16] 0.0, 128
          %817 = vxpose.xlu0.b32.cont [8/16] 0.0, 128
          %818 = vxpose.xlu0.b32.cont [9/16] 0.0, 128
          %819 = vxpose.xlu0.b32.cont [10/16] 0.0, 128
          %820 = vxpose.xlu0.b32.cont [11/16] 0.0, 128
          %821 = vxpose.xlu0.b32.cont [12/16] 0.0, 128
          %822 = vxpose.xlu0.b32.cont [13/16] 0.0, 128
          %823 = vxpose.xlu0.b32.cont [14/16] 0.0, 128
          %824 = vxpose.xlu0.b32.cont [15/16] 0.0, 128
          %825 = vxpose.xlu0.b32.end [16/16] 0.0, 128
          %v826 = vpop.trf.xlu0
          %v827 = vpop.trf.xlu0
          %v828 = vpop.trf.xlu0
          %v829 = vpop.trf.xlu0
          %v830 = vpop.trf.xlu0
          %v831 = vpop.trf.xlu0
          %v832 = vpop.trf.xlu0
          %v833 = vpop.trf.xlu0
          %v834 = vpop.trf.xlu0
          %v835 = vpop.trf.xlu0
          %v836 = vpop.trf.xlu0
          %v837 = vpop.trf.xlu0
          %v838 = vpop.trf.xlu0
          %v839 = vpop.trf.xlu0
          %v840 = vpop.trf.xlu0
          %v841 = vpop.trf.xlu0
          %vm842 = vcmask 130048
          %843 = vst.msk [vmem:[#allocation2] sm:$0xff] %vm842, %v826
          %844 = vxpose.xlu0.b32.start [1/16] %v733, 128
          %845 = vxpose.xlu0.b32.cont [2/16] %v738, 128
          %846 = vxpose.xlu0.b32.cont [3/16] 0.0, 128
          %847 = vxpose.xlu0.b32.cont [4/16] 0.0, 128
          %848 = vxpose.xlu0.b32.cont [5/16] 0.0, 128
          %849 = vxpose.xlu0.b32.cont [6/16] 0.0, 128
          %850 = vxpose.xlu0.b32.cont [7/16] 0.0, 128
          %851 = vxpose.xlu0.b32.cont [8/16] 0.0, 128
          %852 = vxpose.xlu0.b32.cont [9/16] 0.0, 128
          %853 = vxpose.xlu0.b32.cont [10/16] 0.0, 128
          %854 = vxpose.xlu0.b32.cont [11/16] 0.0, 128
          %855 = vxpose.xlu0.b32.cont [12/16] 0.0, 128
          %856 = vxpose.xlu0.b32.cont [13/16] 0.0, 128
          %857 = vxpose.xlu0.b32.cont [14/16] 0.0, 128
          %858 = vxpose.xlu0.b32.cont [15/16] 0.0, 128
          %859 = vxpose.xlu0.b32.end [16/16] 0.0, 128
          %v860 = vpop.trf.xlu0
          %v861 = vpop.trf.xlu0
          %v862 = vpop.trf.xlu0
          %v863 = vpop.trf.xlu0
          %v864 = vpop.trf.xlu0
          %v865 = vpop.trf.xlu0
          %v866 = vpop.trf.xlu0
          %v867 = vpop.trf.xlu0
          %v868 = vpop.trf.xlu0
          %v869 = vpop.trf.xlu0
          %v870 = vpop.trf.xlu0
          %v871 = vpop.trf.xlu0
          %v872 = vpop.trf.xlu0
          %v873 = vpop.trf.xlu0
          %v874 = vpop.trf.xlu0
          %v875 = vpop.trf.xlu0
          %s876 = scalar_lea.vmem [#allocation2], 8
          %877 = vst.msk [vmem:[%s876] sm:$0xff] %vm842, %v860
          %878 = vxpose.xlu0.b32.start [1/16] %v743, 128
          %879 = vxpose.xlu0.b32.cont [2/16] %v748, 128
          %880 = vxpose.xlu0.b32.cont [3/16] 0.0, 128
          %881 = vxpose.xlu0.b32.cont [4/16] 0.0, 128
          %882 = vxpose.xlu0.b32.cont [5/16] 0.0, 128
          %883 = vxpose.xlu0.b32.cont [6/16] 0.0, 128
          %884 = vxpose.xlu0.b32.cont [7/16] 0.0, 128
          %885 = vxpose.xlu0.b32.cont [8/16] 0.0, 128
          %886 = vxpose.xlu0.b32.cont [9/16] 0.0, 128
          %887 = vxpose.xlu0.b32.cont [10/16] 0.0, 128
          %888 = vxpose.xlu0.b32.cont [11/16] 0.0, 128
          %889 = vxpose.xlu0.b32.cont [12/16] 0.0, 128
          %890 = vxpose.xlu0.b32.cont [13/16] 0.0, 128
          %891 = vxpose.xlu0.b32.cont [14/16] 0.0, 128
          %892 = vxpose.xlu0.b32.cont [15/16] 0.0, 128
          %893 = vxpose.xlu0.b32.end [16/16] 0.0, 128
          %v894 = vpop.trf.xlu0
          %v895 = vpop.trf.xlu0
          %v896 = vpop.trf.xlu0
          %v897 = vpop.trf.xlu0
          %v898 = vpop.trf.xlu0
          %v899 = vpop.trf.xlu0
          %v900 = vpop.trf.xlu0
          %v901 = vpop.trf.xlu0
          %v902 = vpop.trf.xlu0
          %v903 = vpop.trf.xlu0
          %v904 = vpop.trf.xlu0
          %v905 = vpop.trf.xlu0
          %v906 = vpop.trf.xlu0
          %v907 = vpop.trf.xlu0
          %v908 = vpop.trf.xlu0
          %v909 = vpop.trf.xlu0
          %s910 = scalar_lea.vmem [#allocation2], 16
          %911 = vst.msk [vmem:[%s910] sm:$0xff] %vm842, %v894
          %912 = vxpose.xlu0.b32.start [1/16] %v753, 128
          %913 = vxpose.xlu0.b32.cont [2/16] %v758, 128
          %914 = vxpose.xlu0.b32.cont [3/16] 0.0, 128
          %915 = vxpose.xlu0.b32.cont [4/16] 0.0, 128
          %916 = vxpose.xlu0.b32.cont [5/16] 0.0, 128
          %917 = vxpose.xlu0.b32.cont [6/16] 0.0, 128
          %918 = vxpose.xlu0.b32.cont [7/16] 0.0, 128
          %919 = vxpose.xlu0.b32.cont [8/16] 0.0, 128
          %920 = vxpose.xlu0.b32.cont [9/16] 0.0, 128
          %921 = vxpose.xlu0.b32.cont [10/16] 0.0, 128
          %922 = vxpose.xlu0.b32.cont [11/16] 0.0, 128
          %923 = vxpose.xlu0.b32.cont [12/16] 0.0, 128
          %924 = vxpose.xlu0.b32.cont [13/16] 0.0, 128
          %925 = vxpose.xlu0.b32.cont [14/16] 0.0, 128
          %926 = vxpose.xlu0.b32.cont [15/16] 0.0, 128
          %927 = vxpose.xlu0.b32.end [16/16] 0.0, 128
          %v928 = vpop.trf.xlu0
          %v929 = vpop.trf.xlu0
          %v930 = vpop.trf.xlu0
          %v931 = vpop.trf.xlu0
          %v932 = vpop.trf.xlu0
          %v933 = vpop.trf.xlu0
          %v934 = vpop.trf.xlu0
          %v935 = vpop.trf.xlu0
          %v936 = vpop.trf.xlu0
          %v937 = vpop.trf.xlu0
          %v938 = vpop.trf.xlu0
          %v939 = vpop.trf.xlu0
          %v940 = vpop.trf.xlu0
          %v941 = vpop.trf.xlu0
          %v942 = vpop.trf.xlu0
          %v943 = vpop.trf.xlu0
          %s944 = scalar_lea.vmem [#allocation2], 24
          %945 = vst.msk [vmem:[%s944] sm:$0xff] %vm842, %v928
        $region84: #{tpu_custom_call.1} parent=79 // pred_fallthru
          _
        %v946 = vld [vmem:[%s4] sm:$0xff]
        %v947 = vld [vmem:[%s4 + $0x8] sm:$0xff]
        %v948 = vld [vmem:[%s4 + $0x10] sm:$0xff]
        %v949 = vld [vmem:[%s4 + $0x18] sm:$0xff]
        %v950 = vld [vmem:[%s4 + $0x20] sm:$0xff]
        %v951 = vld [vmem:[%s4 + $0x28] sm:$0xff]
        %v952 = vld [vmem:[%s4 + $0x30] sm:$0xff]
        %v953 = vld [vmem:[%s4 + $0x38] sm:$0xff]
        %v954 = vld [vmem:[%s571] sm:$0xff]
        %v955 = vld [vmem:[%s571 + $0x8] sm:$0xff]
        %v956 = vld [vmem:[%s571 + $0x10] sm:$0xff]
        %v957 = vld [vmem:[%s571 + $0x18] sm:$0xff]
        %vm958 = vcmask 261120
        %v960 = vsel %vm958, %v946, 0
        %v963 = vsel %vm958, %v947, 0
        %v966 = vsel %vm958, %v948, 0
        %v969 = vsel %vm958, %v949, 0
        %v972 = vsel %vm958, %v950, 0
        %v975 = vsel %vm958, %v951, 0
        %v978 = vsel %vm958, %v952, 0
        %v981 = vsel %vm958, %v953, 0
        %983 = vmatprep.subr.mxu0 0.0
        %984 = vmatpush1.msra.mxu0 0.0
        %985 = vmatprep.subr.mxu0 0.0
        %986 = vmatpush1.msra.mxu0 0.0
        %987 = vmatprep.subr.mxu0 0.0
        %988 = vmatpush1.msra.mxu0 0.0
        %989 = vmatprep.subr.mxu0 0.0
        %990 = vmatpush1.msra.mxu0 0.0
        %991 = vmatprep.subr.mxu0 0.0
        %992 = vmatpush1.msra.mxu0 0.0
        %993 = vmatprep.subr.mxu0 0.0
        %994 = vmatpush1.msra.mxu0 0.0
        %995 = vmatprep.subr.mxu0 0.0
        %996 = vmatpush1.msra.mxu0 0.0
        %997 = vmatprep.subr.mxu0 0.0
        %998 = vmatpush1.msra.mxu0 0.0
        %999 = vmatprep.subr.mxu0 0.0
        %1000 = vmatpush1.msra.mxu0 0.0
        %1001 = vmatprep.subr.mxu0 0.0
        %1002 = vmatpush1.msra.mxu0 0.0
        %1003 = vmatprep.subr.mxu0 0.0
        %1004 = vmatpush1.msra.mxu0 0.0
        %1005 = vmatprep.subr.mxu0 0.0
        %1006 = vmatpush1.msra.mxu0 0.0
        %1007 = vmatprep.subr.mxu0 0.0
        %1008 = vmatpush1.msra.mxu0 %v957
        %1009 = vmatprep.subr.mxu0 0.0
        %1010 = vmatpush1.msra.mxu0 %v956
        %1011 = vmatprep.subr.mxu0 0.0
        %1012 = vmatpush1.msra.mxu0 %v955
        %1013 = vmatprep.subr.mxu0 0.0
        %1014 = vmatpush1.msra.mxu0 %v954
        %1015 = vmatprep.subr.mxu0 0.0
        %1016 = vmatpush2.msra.mxu0 0.0
        %1017 = vmatprep.subr.mxu0 0.0
        %1018 = vmatpush2.msra.mxu0 0.0
        %1019 = vmatprep.subr.mxu0 0.0
        %1020 = vmatpush2.msra.mxu0 0.0
        %1021 = vmatprep.subr.mxu0 0.0
        %1022 = vmatpush2.msra.mxu0 0.0
        %1023 = vmatprep.subr.mxu0 0.0
        %1024 = vmatpush2.msra.mxu0 0.0
        %1025 = vmatprep.subr.mxu0 0.0
        %1026 = vmatpush2.msra.mxu0 0.0
        %1027 = vmatprep.subr.mxu0 0.0
        %1028 = vmatpush2.msra.mxu0 0.0
        %1029 = vmatprep.subr.mxu0 0.0
        %1030 = vmatpush2.msra.mxu0 0.0
        %1031 = vmatprep.subr.mxu0 0.0
        %1032 = vmatpush2.msra.mxu0 0.0
        %1033 = vmatprep.subr.mxu0 0.0
        %1034 = vmatpush2.msra.mxu0 0.0
        %1035 = vmatprep.subr.mxu0 0.0
        %1036 = vmatpush2.msra.mxu0 0.0
        %1037 = vmatprep.subr.mxu0 0.0
        %1038 = vmatpush2.msra.mxu0 0.0
        %1039 = vmatprep.subr.mxu0 0.0
        %1040 = vmatpush2.msra.mxu0 0.0
        %1041 = vmatprep.subr.mxu0 0.0
        %1042 = vmatpush2.msra.mxu0 0.0
        %1043 = vmatprep.subr.mxu0 0.0
        %1044 = vmatpush2.msra.mxu0 0.0
        %1045 = vmatprep.subr.mxu0 0.0
        %1046 = vmatpush2.msra.mxu0 0.0
        %1047 = vmatprep.mubr.f32.mxu0 0.0
        %1048 = vmatmul.mubr.f32.gmra.mxu0 %v960
        %v1049 = vpop.f32.mrf.mxu0
        %v1050 = vadd.f32 0.0, %v1049
        %v1051 = vpop.f32.mrf.mxu0
        %1052 = vmatprep.mubr.f32.mxu0 0.0
        %1053 = vmatmul.mubr.f32.gmra.mxu0 %v963
        %v1054 = vpop.f32.mrf.mxu0
        %v1055 = vadd.f32 0.0, %v1054
        %v1056 = vpop.f32.mrf.mxu0
        %1057 = vmatprep.mubr.f32.mxu0 0.0
        %1058 = vmatmul.mubr.f32.gmra.mxu0 %v966
        %v1059 = vpop.f32.mrf.mxu0
        %v1060 = vadd.f32 0.0, %v1059
        %v1061 = vpop.f32.mrf.mxu0
        %1062 = vmatprep.mubr.f32.mxu0 0.0
        %1063 = vmatmul.mubr.f32.gmra.mxu0 %v969
        %v1064 = vpop.f32.mrf.mxu0
        %v1065 = vadd.f32 0.0, %v1064
        %v1066 = vpop.f32.mrf.mxu0
        %1067 = vmatprep.mubr.f32.mxu0 0.0
        %1068 = vmatmul.mubr.f32.gmra.mxu0 %v972
        %v1069 = vpop.f32.mrf.mxu0
        %v1070 = vadd.f32 0.0, %v1069
        %v1071 = vpop.f32.mrf.mxu0
        %1072 = vmatprep.mubr.f32.mxu0 0.0
        %1073 = vmatmul.mubr.f32.gmra.mxu0 %v975
        %v1074 = vpop.f32.mrf.mxu0
        %v1075 = vadd.f32 0.0, %v1074
        %v1076 = vpop.f32.mrf.mxu0
        %1077 = vmatprep.mubr.f32.mxu0 0.0
        %1078 = vmatmul.mubr.f32.gmra.mxu0 %v978
        %v1079 = vpop.f32.mrf.mxu0
        %v1080 = vadd.f32 0.0, %v1079
        %v1081 = vpop.f32.mrf.mxu0
        %1082 = vmatprep.mubr.f32.mxu0 0.0
        %1083 = vmatmul.mubr.f32.gmra.mxu0 %v981
        %v1084 = vpop.f32.mrf.mxu0
        %v1085 = vadd.f32 0.0, %v1084
        %v1086 = vpop.f32.mrf.mxu0
        %1087 = vdwg.mxu0
        %v1088 = vld [vmem:[%s582] sm:$0xff]
        %v1089 = vld [vmem:[#allocation2] sm:$0xff]
        %v1090 = vld [vmem:[#allocation2 + $0x8] sm:$0xff]
        %v1091 = vld [vmem:[#allocation2 + $0x10] sm:$0xff]
        %v1092 = vld [vmem:[#allocation2 + $0x18] sm:$0xff]
        %1094 = vset.pattern.permute.xlu0 0
        %1095 = vperm.xlu0 %1094, %v1088
        %v1096 = vpop.permute.xlu0 %1095
        %vm1098 = vcmask 130048
        %v1100 = vsel %vm1098, %v1089, 0
        %1102 = vmatprep.subr.mxu0 0.0
        %1103 = vmatpush1.msra.mxu0 0.0
        %1104 = vmatprep.subr.mxu0 0.0
        %1105 = vmatpush1.msra.mxu0 0.0
        %1106 = vmatprep.subr.mxu0 0.0
        %1107 = vmatpush1.msra.mxu0 0.0
        %1108 = vmatprep.subr.mxu0 0.0
        %1109 = vmatpush1.msra.mxu0 0.0
        %1110 = vmatprep.subr.mxu0 0.0
        %1111 = vmatpush1.msra.mxu0 0.0
        %1112 = vmatprep.subr.mxu0 0.0
        %1113 = vmatpush1.msra.mxu0 0.0
        %1114 = vmatprep.subr.mxu0 0.0
        %1115 = vmatpush1.msra.mxu0 0.0
        %1116 = vmatprep.subr.mxu0 0.0
        %1117 = vmatpush1.msra.mxu0 0.0
        %1118 = vmatprep.subr.mxu0 0.0
        %1119 = vmatpush1.msra.mxu0 0.0
        %1120 = vmatprep.subr.mxu0 0.0
        %1121 = vmatpush1.msra.mxu0 0.0
        %1122 = vmatprep.subr.mxu0 0.0
        %1123 = vmatpush1.msra.mxu0 0.0
        %1124 = vmatprep.subr.mxu0 0.0
        %1125 = vmatpush1.msra.mxu0 0.0
        %1126 = vmatprep.subr.mxu0 0.0
        %1127 = vmatpush1.msra.mxu0 0.0
        %1128 = vmatprep.subr.mxu0 0.0
        %1129 = vmatpush1.msra.mxu0 0.0
        %1130 = vmatprep.subr.mxu0 0.0
        %1131 = vmatpush1.msra.mxu0 %v1055
        %1132 = vmatprep.subr.mxu0 0.0
        %1133 = vmatpush1.msra.mxu0 %v1050
        %1134 = vmatprep.subr.mxu0 0.0
        %1135 = vmatpush2.msra.mxu0 0.0
        %1136 = vmatprep.subr.mxu0 0.0
        %1137 = vmatpush2.msra.mxu0 0.0
        %1138 = vmatprep.subr.mxu0 0.0
        %1139 = vmatpush2.msra.mxu0 0.0
        %1140 = vmatprep.subr.mxu0 0.0
        %1141 = vmatpush2.msra.mxu0 0.0
        %1142 = vmatprep.subr.mxu0 0.0
        %1143 = vmatpush2.msra.mxu0 0.0
        %1144 = vmatprep.subr.mxu0 0.0
        %1145 = vmatpush2.msra.mxu0 0.0
        %1146 = vmatprep.subr.mxu0 0.0
        %1147 = vmatpush2.msra.mxu0 0.0
        %1148 = vmatprep.subr.mxu0 0.0
        %1149 = vmatpush2.msra.mxu0 0.0
        %1150 = vmatprep.subr.mxu0 0.0
        %1151 = vmatpush2.msra.mxu0 0.0
        %1152 = vmatprep.subr.mxu0 0.0
        %1153 = vmatpush2.msra.mxu0 0.0
        %1154 = vmatprep.subr.mxu0 0.0
        %1155 = vmatpush2.msra.mxu0 0.0
        %1156 = vmatprep.subr.mxu0 0.0
        %1157 = vmatpush2.msra.mxu0 0.0
        %1158 = vmatprep.subr.mxu0 0.0
        %1159 = vmatpush2.msra.mxu0 0.0
        %1160 = vmatprep.subr.mxu0 0.0
        %1161 = vmatpush2.msra.mxu0 0.0
        %1162 = vmatprep.subr.mxu0 0.0
        %1163 = vmatpush2.msra.mxu0 0.0
        %1164 = vmatprep.subr.mxu0 0.0
        %1165 = vmatpush2.msra.mxu0 0.0
        %1166 = vmatprep.mubr.f32.mxu0 0.0
        %1167 = vmatmul.mubr.f32.gmra.mxu0 %v1100
        %v1168 = vpop.f32.mrf.mxu0
        %v1169 = vadd.f32 %v1096, %v1168
        %v1170 = vpop.f32.mrf.mxu0
        %1171 = vdwg.mxu0
        %v1173 = vsel %vm1098, %v1090, 0
        %1175 = vmatprep.subr.mxu0 0.0
        %1176 = vmatpush1.msra.mxu0 0.0
        %1177 = vmatprep.subr.mxu0 0.0
        %1178 = vmatpush1.msra.mxu0 0.0
        %1179 = vmatprep.subr.mxu0 0.0
        %1180 = vmatpush1.msra.mxu0 0.0
        %1181 = vmatprep.subr.mxu0 0.0
        %1182 = vmatpush1.msra.mxu0 0.0
        %1183 = vmatprep.subr.mxu0 0.0
        %1184 = vmatpush1.msra.mxu0 0.0
        %1185 = vmatprep.subr.mxu0 0.0
        %1186 = vmatpush1.msra.mxu0 0.0
        %1187 = vmatprep.subr.mxu0 0.0
        %1188 = vmatpush1.msra.mxu0 0.0
        %1189 = vmatprep.subr.mxu0 0.0
        %1190 = vmatpush1.msra.mxu0 0.0
        %1191 = vmatprep.subr.mxu0 0.0
        %1192 = vmatpush1.msra.mxu0 0.0
        %1193 = vmatprep.subr.mxu0 0.0
        %1194 = vmatpush1.msra.mxu0 0.0
        %1195 = vmatprep.subr.mxu0 0.0
        %1196 = vmatpush1.msra.mxu0 0.0
        %1197 = vmatprep.subr.mxu0 0.0
        %1198 = vmatpush1.msra.mxu0 0.0
        %1199 = vmatprep.subr.mxu0 0.0
        %1200 = vmatpush1.msra.mxu0 0.0
        %1201 = vmatprep.subr.mxu0 0.0
        %1202 = vmatpush1.msra.mxu0 0.0
        %1203 = vmatprep.subr.mxu0 0.0
        %1204 = vmatpush1.msra.mxu0 %v1065
        %1205 = vmatprep.subr.mxu0 0.0
        %1206 = vmatpush1.msra.mxu0 %v1060
        %1207 = vmatprep.subr.mxu0 0.0
        %1208 = vmatpush2.msra.mxu0 0.0
        %1209 = vmatprep.subr.mxu0 0.0
        %1210 = vmatpush2.msra.mxu0 0.0
        %1211 = vmatprep.subr.mxu0 0.0
        %1212 = vmatpush2.msra.mxu0 0.0
        %1213 = vmatprep.subr.mxu0 0.0
        %1214 = vmatpush2.msra.mxu0 0.0
        %1215 = vmatprep.subr.mxu0 0.0
        %1216 = vmatpush2.msra.mxu0 0.0
        %1217 = vmatprep.subr.mxu0 0.0
        %1218 = vmatpush2.msra.mxu0 0.0
        %1219 = vmatprep.subr.mxu0 0.0
        %1220 = vmatpush2.msra.mxu0 0.0
        %1221 = vmatprep.subr.mxu0 0.0
        %1222 = vmatpush2.msra.mxu0 0.0
        %1223 = vmatprep.subr.mxu0 0.0
        %1224 = vmatpush2.msra.mxu0 0.0
        %1225 = vmatprep.subr.mxu0 0.0
        %1226 = vmatpush2.msra.mxu0 0.0
        %1227 = vmatprep.subr.mxu0 0.0
        %1228 = vmatpush2.msra.mxu0 0.0
        %1229 = vmatprep.subr.mxu0 0.0
        %1230 = vmatpush2.msra.mxu0 0.0
        %1231 = vmatprep.subr.mxu0 0.0
        %1232 = vmatpush2.msra.mxu0 0.0
        %1233 = vmatprep.subr.mxu0 0.0
        %1234 = vmatpush2.msra.mxu0 0.0
        %1235 = vmatprep.subr.mxu0 0.0
        %1236 = vmatpush2.msra.mxu0 0.0
        %1237 = vmatprep.subr.mxu0 0.0
        %1238 = vmatpush2.msra.mxu0 0.0
        %1239 = vmatprep.mubr.f32.mxu0 0.0
        %1240 = vmatmul.mubr.f32.gmra.mxu0 %v1173
        %v1241 = vpop.f32.mrf.mxu0
        %v1242 = vadd.f32 %v1096, %v1241
        %v1243 = vpop.f32.mrf.mxu0
        %1244 = vdwg.mxu0
        %v1246 = vsel %vm1098, %v1091, 0
        %1248 = vmatprep.subr.mxu0 0.0
        %1249 = vmatpush1.msra.mxu0 0.0
        %1250 = vmatprep.subr.mxu0 0.0
        %1251 = vmatpush1.msra.mxu0 0.0
        %1252 = vmatprep.subr.mxu0 0.0
        %1253 = vmatpush1.msra.mxu0 0.0
        %1254 = vmatprep.subr.mxu0 0.0
        %1255 = vmatpush1.msra.mxu0 0.0
        %1256 = vmatprep.subr.mxu0 0.0
        %1257 = vmatpush1.msra.mxu0 0.0
        %1258 = vmatprep.subr.mxu0 0.0
        %1259 = vmatpush1.msra.mxu0 0.0
        %1260 = vmatprep.subr.mxu0 0.0
        %1261 = vmatpush1.msra.mxu0 0.0
        %1262 = vmatprep.subr.mxu0 0.0
        %1263 = vmatpush1.msra.mxu0 0.0
        %1264 = vmatprep.subr.mxu0 0.0
        %1265 = vmatpush1.msra.mxu0 0.0
        %1266 = vmatprep.subr.mxu0 0.0
        %1267 = vmatpush1.msra.mxu0 0.0
        %1268 = vmatprep.subr.mxu0 0.0
        %1269 = vmatpush1.msra.mxu0 0.0
        %1270 = vmatprep.subr.mxu0 0.0
        %1271 = vmatpush1.msra.mxu0 0.0
        %1272 = vmatprep.subr.mxu0 0.0
        %1273 = vmatpush1.msra.mxu0 0.0
        %1274 = vmatprep.subr.mxu0 0.0
        %1275 = vmatpush1.msra.mxu0 0.0
        %1276 = vmatprep.subr.mxu0 0.0
        %1277 = vmatpush1.msra.mxu0 %v1075
        %1278 = vmatprep.subr.mxu0 0.0
        %1279 = vmatpush1.msra.mxu0 %v1070
        %1280 = vmatprep.subr.mxu0 0.0
        %1281 = vmatpush2.msra.mxu0 0.0
        %1282 = vmatprep.subr.mxu0 0.0
        %1283 = vmatpush2.msra.mxu0 0.0
        %1284 = vmatprep.subr.mxu0 0.0
        %1285 = vmatpush2.msra.mxu0 0.0
        %1286 = vmatprep.subr.mxu0 0.0
        %1287 = vmatpush2.msra.mxu0 0.0
        %1288 = vmatprep.subr.mxu0 0.0
        %1289 = vmatpush2.msra.mxu0 0.0
        %1290 = vmatprep.subr.mxu0 0.0
        %1291 = vmatpush2.msra.mxu0 0.0
        %1292 = vmatprep.subr.mxu0 0.0
        %1293 = vmatpush2.msra.mxu0 0.0
        %1294 = vmatprep.subr.mxu0 0.0
        %1295 = vmatpush2.msra.mxu0 0.0
        %1296 = vmatprep.subr.mxu0 0.0
        %1297 = vmatpush2.msra.mxu0 0.0
        %1298 = vmatprep.subr.mxu0 0.0
        %1299 = vmatpush2.msra.mxu0 0.0
        %1300 = vmatprep.subr.mxu0 0.0
        %1301 = vmatpush2.msra.mxu0 0.0
        %1302 = vmatprep.subr.mxu0 0.0
        %1303 = vmatpush2.msra.mxu0 0.0
        %1304 = vmatprep.subr.mxu0 0.0
        %1305 = vmatpush2.msra.mxu0 0.0
        %1306 = vmatprep.subr.mxu0 0.0
        %1307 = vmatpush2.msra.mxu0 0.0
        %1308 = vmatprep.subr.mxu0 0.0
        %1309 = vmatpush2.msra.mxu0 0.0
        %1310 = vmatprep.subr.mxu0 0.0
        %1311 = vmatpush2.msra.mxu0 0.0
        %1312 = vmatprep.mubr.f32.mxu0 0.0
        %1313 = vmatmul.mubr.f32.gmra.mxu0 %v1246
        %v1314 = vpop.f32.mrf.mxu0
        %v1315 = vadd.f32 %v1096, %v1314
        %v1316 = vpop.f32.mrf.mxu0
        %1317 = vdwg.mxu0
        %v1319 = vsel %vm1098, %v1092, 0
        %1321 = vmatprep.subr.mxu0 0.0
        %1322 = vmatpush1.msra.mxu0 0.0
        %1323 = vmatprep.subr.mxu0 0.0
        %1324 = vmatpush1.msra.mxu0 0.0
        %1325 = vmatprep.subr.mxu0 0.0
        %1326 = vmatpush1.msra.mxu0 0.0
        %1327 = vmatprep.subr.mxu0 0.0
        %1328 = vmatpush1.msra.mxu0 0.0
        %1329 = vmatprep.subr.mxu0 0.0
        %1330 = vmatpush1.msra.mxu0 0.0
        %1331 = vmatprep.subr.mxu0 0.0
        %1332 = vmatpush1.msra.mxu0 0.0
        %1333 = vmatprep.subr.mxu0 0.0
        %1334 = vmatpush1.msra.mxu0 0.0
        %1335 = vmatprep.subr.mxu0 0.0
        %1336 = vmatpush1.msra.mxu0 0.0
        %1337 = vmatprep.subr.mxu0 0.0
        %1338 = vmatpush1.msra.mxu0 0.0
        %1339 = vmatprep.subr.mxu0 0.0
        %1340 = vmatpush1.msra.mxu0 0.0
        %1341 = vmatprep.subr.mxu0 0.0
        %1342 = vmatpush1.msra.mxu0 0.0
        %1343 = vmatprep.subr.mxu0 0.0
        %1344 = vmatpush1.msra.mxu0 0.0
        %1345 = vmatprep.subr.mxu0 0.0
        %1346 = vmatpush1.msra.mxu0 0.0
        %1347 = vmatprep.subr.mxu0 0.0
        %1348 = vmatpush1.msra.mxu0 0.0
        %1349 = vmatprep.subr.mxu0 0.0
        %1350 = vmatpush1.msra.mxu0 %v1085
        %1351 = vmatprep.subr.mxu0 0.0
        %1352 = vmatpush1.msra.mxu0 %v1080
        %1353 = vmatprep.subr.mxu0 0.0
        %1354 = vmatpush2.msra.mxu0 0.0
        %1355 = vmatprep.subr.mxu0 0.0
        %1356 = vmatpush2.msra.mxu0 0.0
        %1357 = vmatprep.subr.mxu0 0.0
        %1358 = vmatpush2.msra.mxu0 0.0
        %1359 = vmatprep.subr.mxu0 0.0
        %1360 = vmatpush2.msra.mxu0 0.0
        %1361 = vmatprep.subr.mxu0 0.0
        %1362 = vmatpush2.msra.mxu0 0.0
        %1363 = vmatprep.subr.mxu0 0.0
        %1364 = vmatpush2.msra.mxu0 0.0
        %1365 = vmatprep.subr.mxu0 0.0
        %1366 = vmatpush2.msra.mxu0 0.0
        %1367 = vmatprep.subr.mxu0 0.0
        %1368 = vmatpush2.msra.mxu0 0.0
        %1369 = vmatprep.subr.mxu0 0.0
        %1370 = vmatpush2.msra.mxu0 0.0
        %1371 = vmatprep.subr.mxu0 0.0
        %1372 = vmatpush2.msra.mxu0 0.0
        %1373 = vmatprep.subr.mxu0 0.0
        %1374 = vmatpush2.msra.mxu0 0.0
        %1375 = vmatprep.subr.mxu0 0.0
        %1376 = vmatpush2.msra.mxu0 0.0
        %1377 = vmatprep.subr.mxu0 0.0
        %1378 = vmatpush2.msra.mxu0 0.0
        %1379 = vmatprep.subr.mxu0 0.0
        %1380 = vmatpush2.msra.mxu0 0.0
        %1381 = vmatprep.subr.mxu0 0.0
        %1382 = vmatpush2.msra.mxu0 0.0
        %1383 = vmatprep.subr.mxu0 0.0
        %1384 = vmatpush2.msra.mxu0 0.0
        %1385 = vmatprep.mubr.f32.mxu0 0.0
        %1386 = vmatmul.mubr.f32.gmra.mxu0 %v1319
        %v1387 = vpop.f32.mrf.mxu0
        %v1388 = vadd.f32 %v1096, %v1387
        %v1389 = vpop.f32.mrf.mxu0
        %1390 = vdwg.mxu0
        %vm1391 = vcmask 64512
        %v1392 = vsel %vm1391, %v1169, -inf
        %v1393 = vrot.slane %v1392, 4
        %v1394 = vmax.f32 %v1392, %v1393
        %v1395 = vrot.slane %v1394, 2
        %v1396 = vmax.f32 %v1394, %v1395
        %v1397 = vrot.slane %v1396, 1
        %v1398 = vmax.f32 %v1396, %v1397
        %v1399 = vsel %vm1391, %v1242, -inf
        %v1400 = vrot.slane %v1399, 4
        %v1401 = vmax.f32 %v1399, %v1400
        %v1402 = vrot.slane %v1401, 2
        %v1403 = vmax.f32 %v1401, %v1402
        %v1404 = vrot.slane %v1403, 1
        %v1405 = vmax.f32 %v1403, %v1404
        %v1406 = vsel %vm1391, %v1315, -inf
        %v1407 = vrot.slane %v1406, 4
        %v1408 = vmax.f32 %v1406, %v1407
        %v1409 = vrot.slane %v1408, 2
        %v1410 = vmax.f32 %v1408, %v1409
        %v1411 = vrot.slane %v1410, 1
        %v1412 = vmax.f32 %v1410, %v1411
        %v1413 = vsel %vm1391, %v1388, -inf
        %v1414 = vrot.slane %v1413, 4
        %v1415 = vmax.f32 %v1413, %v1414
        %v1416 = vrot.slane %v1415, 2
        %v1417 = vmax.f32 %v1415, %v1416
        %v1418 = vrot.slane %v1417, 1
        %v1419 = vmax.f32 %v1417, %v1418
        %v1420 = vsub.f32 %v1169, %v1398
        %v1421 = vsub.f32 %v1242, %v1405
        %v1422 = vsub.f32 %v1315, %v1412
        %v1423 = vsub.f32 %v1388, %v1419
        %v1424 = vmul.f32 %v1420, 1.442695
        %v1425 = vpow.pop %v1424
        %v1426 = vmul.f32 %v1421, 1.442695
        %v1427 = vpow.pop %v1426
        %v1428 = vmul.f32 %v1422, 1.442695
        %v1429 = vpow.pop %v1428
        %v1430 = vmul.f32 %v1423, 1.442695
        %v1431 = vpow.pop %v1430
        %v1432 = vsel %vm1391, %v1425, 0.0
        %v1433 = vrot.slane %v1432, 4
        %v1434 = vadd.f32 %v1432, %v1433
        %v1435 = vrot.slane %v1434, 2
        %v1436 = vadd.f32 %v1434, %v1435
        %v1437 = vrot.slane %v1436, 1
        %v1438 = vadd.f32 %v1436, %v1437
        %v1439 = vsel %vm1391, %v1427, 0.0
        %v1440 = vrot.slane %v1439, 4
        %v1441 = vadd.f32 %v1439, %v1440
        %v1442 = vrot.slane %v1441, 2
        %v1443 = vadd.f32 %v1441, %v1442
        %v1444 = vrot.slane %v1443, 1
        %v1445 = vadd.f32 %v1443, %v1444
        %v1446 = vsel %vm1391, %v1429, 0.0
        %v1447 = vrot.slane %v1446, 4
        %v1448 = vadd.f32 %v1446, %v1447
        %v1449 = vrot.slane %v1448, 2
        %v1450 = vadd.f32 %v1448, %v1449
        %v1451 = vrot.slane %v1450, 1
        %v1452 = vadd.f32 %v1450, %v1451
        %v1453 = vsel %vm1391, %v1431, 0.0
        %v1454 = vrot.slane %v1453, 4
        %v1455 = vadd.f32 %v1453, %v1454
        %v1456 = vrot.slane %v1455, 2
        %v1457 = vadd.f32 %v1455, %v1456
        %v1458 = vrot.slane %v1457, 1
        %v1459 = vadd.f32 %v1457, %v1458
        %v1460 = vrcp.pop %v1438
        %v1461 = vmul.f32 %v1425, %v1460
        %v1462 = vrcp.pop %v1445
        %v1463 = vmul.f32 %v1427, %v1462
        %v1464 = vrcp.pop %v1452
        %v1465 = vmul.f32 %v1429, %v1464
        %v1466 = vrcp.pop %v1459
        %v1467 = vmul.f32 %v1431, %v1466
        %v1468 = vld [vmem:[#allocation3] sm:$0xff]
        %v1469 = vld [vmem:[#allocation3 + $0x8] sm:$0xff]
        %v1470 = vld [vmem:[#allocation3 + $0x10] sm:$0xff]
        %v1471 = vld [vmem:[#allocation3 + $0x18] sm:$0xff]
        %v1472 = vld [vmem:[#allocation3 + $0x20] sm:$0xff]
        %v1473 = vld [vmem:[#allocation3 + $0x28] sm:$0xff]
        %v1474 = vld [vmem:[#allocation3 + $0x30] sm:$0xff]
        %v1475 = vld [vmem:[#allocation3 + $0x38] sm:$0xff]
        %v1477 = vsel %vm1391, %v1468, 0
        %v1480 = vsel %vm1391, %v1469, 0
        %1482 = vmatprep.subr.mxu0 0.0
        %1483 = vmatpush1.msra.mxu0 0.0
        %1484 = vmatprep.subr.mxu0 0.0
        %1485 = vmatpush1.msra.mxu0 0.0
        %1486 = vmatprep.subr.mxu0 0.0
        %1487 = vmatpush1.msra.mxu0 0.0
        %1488 = vmatprep.subr.mxu0 0.0
        %1489 = vmatpush1.msra.mxu0 0.0
        %1490 = vmatprep.subr.mxu0 0.0
        %1491 = vmatpush1.msra.mxu0 0.0
        %1492 = vmatprep.subr.mxu0 0.0
        %1493 = vmatpush1.msra.mxu0 0.0
        %1494 = vmatprep.subr.mxu0 0.0
        %1495 = vmatpush1.msra.mxu0 0.0
        %1496 = vmatprep.subr.mxu0 0.0
        %1497 = vmatpush1.msra.mxu0 0.0
        %1498 = vmatprep.subr.mxu0 0.0
        %1499 = vmatpush1.msra.mxu0 0.0
        %1500 = vmatprep.subr.mxu0 0.0
        %1501 = vmatpush1.msra.mxu0 0.0
        %1502 = vmatprep.subr.mxu0 0.0
        %1503 = vmatpush1.msra.mxu0 0.0
        %1504 = vmatprep.subr.mxu0 0.0
        %1505 = vmatpush1.msra.mxu0 0.0
        %1506 = vmatprep.subr.mxu0 0.0
        %1507 = vmatpush1.msra.mxu0 0.0
        %1508 = vmatprep.subr.mxu0 0.0
        %1509 = vmatpush1.msra.mxu0 0.0
        %1510 = vmatprep.subr.mxu0 0.0
        %1511 = vmatpush1.msra.mxu0 0.0
        %1512 = vmatprep.subr.mxu0 0.0
        %1513 = vmatpush1.msra.mxu0 %v1461
        %1514 = vmatprep.subr.mxu0 0.0
        %1515 = vmatpush2.msra.mxu0 0.0
        %1516 = vmatprep.subr.mxu0 0.0
        %1517 = vmatpush2.msra.mxu0 0.0
        %1518 = vmatprep.subr.mxu0 0.0
        %1519 = vmatpush2.msra.mxu0 0.0
        %1520 = vmatprep.subr.mxu0 0.0
        %1521 = vmatpush2.msra.mxu0 0.0
        %1522 = vmatprep.subr.mxu0 0.0
        %1523 = vmatpush2.msra.mxu0 0.0
        %1524 = vmatprep.subr.mxu0 0.0
        %1525 = vmatpush2.msra.mxu0 0.0
        %1526 = vmatprep.subr.mxu0 0.0
        %1527 = vmatpush2.msra.mxu0 0.0
        %1528 = vmatprep.subr.mxu0 0.0
        %1529 = vmatpush2.msra.mxu0 0.0
        %1530 = vmatprep.subr.mxu0 0.0
        %1531 = vmatpush2.msra.mxu0 0.0
        %1532 = vmatprep.subr.mxu0 0.0
        %1533 = vmatpush2.msra.mxu0 0.0
        %1534 = vmatprep.subr.mxu0 0.0
        %1535 = vmatpush2.msra.mxu0 0.0
        %1536 = vmatprep.subr.mxu0 0.0
        %1537 = vmatpush2.msra.mxu0 0.0
        %1538 = vmatprep.subr.mxu0 0.0
        %1539 = vmatpush2.msra.mxu0 0.0
        %1540 = vmatprep.subr.mxu0 0.0
        %1541 = vmatpush2.msra.mxu0 0.0
        %1542 = vmatprep.subr.mxu0 0.0
        %1543 = vmatpush2.msra.mxu0 0.0
        %1544 = vmatprep.subr.mxu0 0.0
        %1545 = vmatpush2.msra.mxu0 0.0
        %1546 = vmatprep.mubr.f32.mxu0 0.0
        %1547 = vmatmul.mubr.f32.gmra.mxu0 %v1477
        %v1548 = vpop.f32.mrf.mxu0
        %v1549 = vadd.f32 0.0, %v1548
        %v1550 = vpop.f32.mrf.mxu0
        %1551 = vmatprep.mubr.f32.mxu0 0.0
        %1552 = vmatmul.mubr.f32.gmra.mxu0 %v1480
        %v1553 = vpop.f32.mrf.mxu0
        %v1554 = vadd.f32 0.0, %v1553
        %v1555 = vpop.f32.mrf.mxu0
        %1556 = vdwg.mxu0
        %v1558 = vsel %vm1391, %v1470, 0
        %v1561 = vsel %vm1391, %v1471, 0
        %1563 = vmatprep.subr.mxu0 0.0
        %1564 = vmatpush1.msra.mxu0 0.0
        %1565 = vmatprep.subr.mxu0 0.0
        %1566 = vmatpush1.msra.mxu0 0.0
        %1567 = vmatprep.subr.mxu0 0.0
        %1568 = vmatpush1.msra.mxu0 0.0
        %1569 = vmatprep.subr.mxu0 0.0
        %1570 = vmatpush1.msra.mxu0 0.0
        %1571 = vmatprep.subr.mxu0 0.0
        %1572 = vmatpush1.msra.mxu0 0.0
        %1573 = vmatprep.subr.mxu0 0.0
        %1574 = vmatpush1.msra.mxu0 0.0
        %1575 = vmatprep.subr.mxu0 0.0
        %1576 = vmatpush1.msra.mxu0 0.0
        %1577 = vmatprep.subr.mxu0 0.0
        %1578 = vmatpush1.msra.mxu0 0.0
        %1579 = vmatprep.subr.mxu0 0.0
        %1580 = vmatpush1.msra.mxu0 0.0
        %1581 = vmatprep.subr.mxu0 0.0
        %1582 = vmatpush1.msra.mxu0 0.0
        %1583 = vmatprep.subr.mxu0 0.0
        %1584 = vmatpush1.msra.mxu0 0.0
        %1585 = vmatprep.subr.mxu0 0.0
        %1586 = vmatpush1.msra.mxu0 0.0
        %1587 = vmatprep.subr.mxu0 0.0
        %1588 = vmatpush1.msra.mxu0 0.0
        %1589 = vmatprep.subr.mxu0 0.0
        %1590 = vmatpush1.msra.mxu0 0.0
        %1591 = vmatprep.subr.mxu0 0.0
        %1592 = vmatpush1.msra.mxu0 0.0
        %1593 = vmatprep.subr.mxu0 0.0
        %1594 = vmatpush1.msra.mxu0 %v1463
        %1595 = vmatprep.subr.mxu0 0.0
        %1596 = vmatpush2.msra.mxu0 0.0
        %1597 = vmatprep.subr.mxu0 0.0
        %1598 = vmatpush2.msra.mxu0 0.0
        %1599 = vmatprep.subr.mxu0 0.0
        %1600 = vmatpush2.msra.mxu0 0.0
        %1601 = vmatprep.subr.mxu0 0.0
        %1602 = vmatpush2.msra.mxu0 0.0
        %1603 = vmatprep.subr.mxu0 0.0
        %1604 = vmatpush2.msra.mxu0 0.0
        %1605 = vmatprep.subr.mxu0 0.0
        %1606 = vmatpush2.msra.mxu0 0.0
        %1607 = vmatprep.subr.mxu0 0.0
        %1608 = vmatpush2.msra.mxu0 0.0
        %1609 = vmatprep.subr.mxu0 0.0
        %1610 = vmatpush2.msra.mxu0 0.0
        %1611 = vmatprep.subr.mxu0 0.0
        %1612 = vmatpush2.msra.mxu0 0.0
        %1613 = vmatprep.subr.mxu0 0.0
        %1614 = vmatpush2.msra.mxu0 0.0
        %1615 = vmatprep.subr.mxu0 0.0
        %1616 = vmatpush2.msra.mxu0 0.0
        %1617 = vmatprep.subr.mxu0 0.0
        %1618 = vmatpush2.msra.mxu0 0.0
        %1619 = vmatprep.subr.mxu0 0.0
        %1620 = vmatpush2.msra.mxu0 0.0
        %1621 = vmatprep.subr.mxu0 0.0
        %1622 = vmatpush2.msra.mxu0 0.0
        %1623 = vmatprep.subr.mxu0 0.0
        %1624 = vmatpush2.msra.mxu0 0.0
        %1625 = vmatprep.subr.mxu0 0.0
        %1626 = vmatpush2.msra.mxu0 0.0
        %1627 = vmatprep.mubr.f32.mxu0 0.0
        %1628 = vmatmul.mubr.f32.gmra.mxu0 %v1558
        %v1629 = vpop.f32.mrf.mxu0
        %v1630 = vadd.f32 0.0, %v1629
        %v1631 = vpop.f32.mrf.mxu0
        %1632 = vmatprep.mubr.f32.mxu0 0.0
        %1633 = vmatmul.mubr.f32.gmra.mxu0 %v1561
        %v1634 = vpop.f32.mrf.mxu0
        %v1635 = vadd.f32 0.0, %v1634
        %v1636 = vpop.f32.mrf.mxu0
        %1637 = vdwg.mxu0
        %v1639 = vsel %vm1391, %v1472, 0
        %v1642 = vsel %vm1391, %v1473, 0
        %1644 = vmatprep.subr.mxu0 0.0
        %1645 = vmatpush1.msra.mxu0 0.0
        %1646 = vmatprep.subr.mxu0 0.0
        %1647 = vmatpush1.msra.mxu0 0.0
        %1648 = vmatprep.subr.mxu0 0.0
        %1649 = vmatpush1.msra.mxu0 0.0
        %1650 = vmatprep.subr.mxu0 0.0
        %1651 = vmatpush1.msra.mxu0 0.0
        %1652 = vmatprep.subr.mxu0 0.0
        %1653 = vmatpush1.msra.mxu0 0.0
        %1654 = vmatprep.subr.mxu0 0.0
        %1655 = vmatpush1.msra.mxu0 0.0
        %1656 = vmatprep.subr.mxu0 0.0
        %1657 = vmatpush1.msra.mxu0 0.0
        %1658 = vmatprep.subr.mxu0 0.0
        %1659 = vmatpush1.msra.mxu0 0.0
        %1660 = vmatprep.subr.mxu0 0.0
        %1661 = vmatpush1.msra.mxu0 0.0
        %1662 = vmatprep.subr.mxu0 0.0
        %1663 = vmatpush1.msra.mxu0 0.0
        %1664 = vmatprep.subr.mxu0 0.0
        %1665 = vmatpush1.msra.mxu0 0.0
        %1666 = vmatprep.subr.mxu0 0.0
        %1667 = vmatpush1.msra.mxu0 0.0
        %1668 = vmatprep.subr.mxu0 0.0
        %1669 = vmatpush1.msra.mxu0 0.0
        %1670 = vmatprep.subr.mxu0 0.0
        %1671 = vmatpush1.msra.mxu0 0.0
        %1672 = vmatprep.subr.mxu0 0.0
        %1673 = vmatpush1.msra.mxu0 0.0
        %1674 = vmatprep.subr.mxu0 0.0
        %1675 = vmatpush1.msra.mxu0 %v1465
        %1676 = vmatprep.subr.mxu0 0.0
        %1677 = vmatpush2.msra.mxu0 0.0
        %1678 = vmatprep.subr.mxu0 0.0
        %1679 = vmatpush2.msra.mxu0 0.0
        %1680 = vmatprep.subr.mxu0 0.0
        %1681 = vmatpush2.msra.mxu0 0.0
        %1682 = vmatprep.subr.mxu0 0.0
        %1683 = vmatpush2.msra.mxu0 0.0
        %1684 = vmatprep.subr.mxu0 0.0
        %1685 = vmatpush2.msra.mxu0 0.0
        %1686 = vmatprep.subr.mxu0 0.0
        %1687 = vmatpush2.msra.mxu0 0.0
        %1688 = vmatprep.subr.mxu0 0.0
        %1689 = vmatpush2.msra.mxu0 0.0
        %1690 = vmatprep.subr.mxu0 0.0
        %1691 = vmatpush2.msra.mxu0 0.0
        %1692 = vmatprep.subr.mxu0 0.0
        %1693 = vmatpush2.msra.mxu0 0.0
        %1694 = vmatprep.subr.mxu0 0.0
        %1695 = vmatpush2.msra.mxu0 0.0
        %1696 = vmatprep.subr.mxu0 0.0
        %1697 = vmatpush2.msra.mxu0 0.0
        %1698 = vmatprep.subr.mxu0 0.0
        %1699 = vmatpush2.msra.mxu0 0.0
        %1700 = vmatprep.subr.mxu0 0.0
        %1701 = vmatpush2.msra.mxu0 0.0
        %1702 = vmatprep.subr.mxu0 0.0
        %1703 = vmatpush2.msra.mxu0 0.0
        %1704 = vmatprep.subr.mxu0 0.0
        %1705 = vmatpush2.msra.mxu0 0.0
        %1706 = vmatprep.subr.mxu0 0.0
        %1707 = vmatpush2.msra.mxu0 0.0
        %1708 = vmatprep.mubr.f32.mxu0 0.0
        %1709 = vmatmul.mubr.f32.gmra.mxu0 %v1639
        %v1710 = vpop.f32.mrf.mxu0
        %v1711 = vadd.f32 0.0, %v1710
        %v1712 = vpop.f32.mrf.mxu0
        %1713 = vmatprep.mubr.f32.mxu0 0.0
        %1714 = vmatmul.mubr.f32.gmra.mxu0 %v1642
        %v1715 = vpop.f32.mrf.mxu0
        %v1716 = vadd.f32 0.0, %v1715
        %v1717 = vpop.f32.mrf.mxu0
        %1718 = vdwg.mxu0
        %v1720 = vsel %vm1391, %v1474, 0
        %v1723 = vsel %vm1391, %v1475, 0
        %1725 = vmatprep.subr.mxu0 0.0
        %1726 = vmatpush1.msra.mxu0 0.0
        %1727 = vmatprep.subr.mxu0 0.0
        %1728 = vmatpush1.msra.mxu0 0.0
        %1729 = vmatprep.subr.mxu0 0.0
        %1730 = vmatpush1.msra.mxu0 0.0
        %1731 = vmatprep.subr.mxu0 0.0
        %1732 = vmatpush1.msra.mxu0 0.0
        %1733 = vmatprep.subr.mxu0 0.0
        %1734 = vmatpush1.msra.mxu0 0.0
        %1735 = vmatprep.subr.mxu0 0.0
        %1736 = vmatpush1.msra.mxu0 0.0
        %1737 = vmatprep.subr.mxu0 0.0
        %1738 = vmatpush1.msra.mxu0 0.0
        %1739 = vmatprep.subr.mxu0 0.0
        %1740 = vmatpush1.msra.mxu0 0.0
        %1741 = vmatprep.subr.mxu0 0.0
        %1742 = vmatpush1.msra.mxu0 0.0
        %1743 = vmatprep.subr.mxu0 0.0
        %1744 = vmatpush1.msra.mxu0 0.0
        %1745 = vmatprep.subr.mxu0 0.0
        %1746 = vmatpush1.msra.mxu0 0.0
        %1747 = vmatprep.subr.mxu0 0.0
        %1748 = vmatpush1.msra.mxu0 0.0
        %1749 = vmatprep.subr.mxu0 0.0
        %1750 = vmatpush1.msra.mxu0 0.0
        %1751 = vmatprep.subr.mxu0 0.0
        %1752 = vmatpush1.msra.mxu0 0.0
        %1753 = vmatprep.subr.mxu0 0.0
        %1754 = vmatpush1.msra.mxu0 0.0
        %1755 = vmatprep.subr.mxu0 0.0
        %1756 = vmatpush1.msra.mxu0 %v1467
        %1757 = vmatprep.subr.mxu0 0.0
        %1758 = vmatpush2.msra.mxu0 0.0
        %1759 = vmatprep.subr.mxu0 0.0
        %1760 = vmatpush2.msra.mxu0 0.0
        %1761 = vmatprep.subr.mxu0 0.0
        %1762 = vmatpush2.msra.mxu0 0.0
        %1763 = vmatprep.subr.mxu0 0.0
        %1764 = vmatpush2.msra.mxu0 0.0
        %1765 = vmatprep.subr.mxu0 0.0
        %1766 = vmatpush2.msra.mxu0 0.0
        %1767 = vmatprep.subr.mxu0 0.0
        %1768 = vmatpush2.msra.mxu0 0.0
        %1769 = vmatprep.subr.mxu0 0.0
        %1770 = vmatpush2.msra.mxu0 0.0
        %1771 = vmatprep.subr.mxu0 0.0
        %1772 = vmatpush2.msra.mxu0 0.0
        %1773 = vmatprep.subr.mxu0 0.0
        %1774 = vmatpush2.msra.mxu0 0.0
        %1775 = vmatprep.subr.mxu0 0.0
        %1776 = vmatpush2.msra.mxu0 0.0
        %1777 = vmatprep.subr.mxu0 0.0
        %1778 = vmatpush2.msra.mxu0 0.0
        %1779 = vmatprep.subr.mxu0 0.0
        %1780 = vmatpush2.msra.mxu0 0.0
        %1781 = vmatprep.subr.mxu0 0.0
        %1782 = vmatpush2.msra.mxu0 0.0
        %1783 = vmatprep.subr.mxu0 0.0
        %1784 = vmatpush2.msra.mxu0 0.0
        %1785 = vmatprep.subr.mxu0 0.0
        %1786 = vmatpush2.msra.mxu0 0.0
        %1787 = vmatprep.subr.mxu0 0.0
        %1788 = vmatpush2.msra.mxu0 0.0
        %1789 = vmatprep.mubr.f32.mxu0 0.0
        %1790 = vmatmul.mubr.f32.gmra.mxu0 %v1720
        %v1791 = vpop.f32.mrf.mxu0
        %v1792 = vadd.f32 0.0, %v1791
        %v1793 = vpop.f32.mrf.mxu0
        %1794 = vmatprep.mubr.f32.mxu0 0.0
        %1795 = vmatmul.mubr.f32.gmra.mxu0 %v1723
        %v1796 = vpop.f32.mrf.mxu0
        %v1797 = vadd.f32 0.0, %v1796
        %v1798 = vpop.f32.mrf.mxu0
        %1799 = vdwg.mxu0
        %v1800 = vld [vmem:[%s6] sm:$0xff]
        %v1801 = vld [vmem:[%s6 + $0x8] sm:$0xff]
        %v1802 = vld [vmem:[%s6 + $0x10] sm:$0xff]
        %v1803 = vld [vmem:[%s6 + $0x18] sm:$0xff]
        %vm1804 = vcmask 523264
        %v1806 = vsel %vm1804, %v1800, 0
        %v1809 = vsel %vm1804, %v1801, 0
        %v1812 = vsel %vm1804, %v1802, 0
        %v1815 = vsel %vm1804, %v1803, 0
        %1817 = vmatprep.subr.mxu0 0.0
        %1818 = vmatpush1.msra.mxu0 0.0
        %1819 = vmatprep.subr.mxu0 0.0
        %1820 = vmatpush1.msra.mxu0 0.0
        %1821 = vmatprep.subr.mxu0 0.0
        %1822 = vmatpush1.msra.mxu0 0.0
        %1823 = vmatprep.subr.mxu0 0.0
        %1824 = vmatpush1.msra.mxu0 0.0
        %1825 = vmatprep.subr.mxu0 0.0
        %1826 = vmatpush1.msra.mxu0 0.0
        %1827 = vmatprep.subr.mxu0 0.0
        %1828 = vmatpush1.msra.mxu0 0.0
        %1829 = vmatprep.subr.mxu0 0.0
        %1830 = vmatpush1.msra.mxu0 0.0
        %1831 = vmatprep.subr.mxu0 0.0
        %1832 = vmatpush1.msra.mxu0 0.0
        %1833 = vmatprep.subr.mxu0 0.0
        %1834 = vmatpush1.msra.mxu0 %v1797
        %1835 = vmatprep.subr.mxu0 0.0
        %1836 = vmatpush1.msra.mxu0 %v1792
        %1837 = vmatprep.subr.mxu0 0.0
        %1838 = vmatpush1.msra.mxu0 %v1716
        %1839 = vmatprep.subr.mxu0 0.0
        %1840 = vmatpush1.msra.mxu0 %v1711
        %1841 = vmatprep.subr.mxu0 0.0
        %1842 = vmatpush1.msra.mxu0 %v1635
        %1843 = vmatprep.subr.mxu0 0.0
        %1844 = vmatpush1.msra.mxu0 %v1630
        %1845 = vmatprep.subr.mxu0 0.0
        %1846 = vmatpush1.msra.mxu0 %v1554
        %1847 = vmatprep.subr.mxu0 0.0
        %1848 = vmatpush1.msra.mxu0 %v1549
        %1849 = vmatprep.subr.mxu0 0.0
        %1850 = vmatpush2.msra.mxu0 0.0
        %1851 = vmatprep.subr.mxu0 0.0
        %1852 = vmatpush2.msra.mxu0 0.0
        %1853 = vmatprep.subr.mxu0 0.0
        %1854 = vmatpush2.msra.mxu0 0.0
        %1855 = vmatprep.subr.mxu0 0.0
        %1856 = vmatpush2.msra.mxu0 0.0
        %1857 = vmatprep.subr.mxu0 0.0
        %1858 = vmatpush2.msra.mxu0 0.0
        %1859 = vmatprep.subr.mxu0 0.0
        %1860 = vmatpush2.msra.mxu0 0.0
        %1861 = vmatprep.subr.mxu0 0.0
        %1862 = vmatpush2.msra.mxu0 0.0
        %1863 = vmatprep.subr.mxu0 0.0
        %1864 = vmatpush2.msra.mxu0 0.0
        %1865 = vmatprep.subr.mxu0 0.0
        %1866 = vmatpush2.msra.mxu0 0.0
        %1867 = vmatprep.subr.mxu0 0.0
        %1868 = vmatpush2.msra.mxu0 0.0
        %1869 = vmatprep.subr.mxu0 0.0
        %1870 = vmatpush2.msra.mxu0 0.0
        %1871 = vmatprep.subr.mxu0 0.0
        %1872 = vmatpush2.msra.mxu0 0.0
        %1873 = vmatprep.subr.mxu0 0.0
        %1874 = vmatpush2.msra.mxu0 0.0
        %1875 = vmatprep.subr.mxu0 0.0
        %1876 = vmatpush2.msra.mxu0 0.0
        %1877 = vmatprep.subr.mxu0 0.0
        %1878 = vmatpush2.msra.mxu0 0.0
        %1879 = vmatprep.subr.mxu0 0.0
        %1880 = vmatpush2.msra.mxu0 0.0
        %1881 = vmatprep.mubr.f32.mxu0 0.0
        %1882 = vmatmul.mubr.f32.gmra.mxu0 %v1806
        %v1883 = vpop.f32.mrf.mxu0
        %v1884 = vadd.f32 0.0, %v1883
        %v1885 = vpop.f32.mrf.mxu0
        %1886 = vmatprep.mubr.f32.mxu0 0.0
        %1887 = vmatmul.mubr.f32.gmra.mxu0 %v1809
        %v1888 = vpop.f32.mrf.mxu0
        %v1889 = vadd.f32 0.0, %v1888
        %v1890 = vpop.f32.mrf.mxu0
        %1891 = vmatprep.mubr.f32.mxu0 0.0
        %1892 = vmatmul.mubr.f32.gmra.mxu0 %v1812
        %v1893 = vpop.f32.mrf.mxu0
        %v1894 = vadd.f32 0.0, %v1893
        %v1895 = vpop.f32.mrf.mxu0
        %1896 = vmatprep.mubr.f32.mxu0 0.0
        %1897 = vmatmul.mubr.f32.gmra.mxu0 %v1815
        %v1898 = vpop.f32.mrf.mxu0
        %v1899 = vadd.f32 0.0, %v1898
        %v1900 = vpop.f32.mrf.mxu0
        %1901 = vdwg.mxu0
        %1902 = vxpose.xlu0.b32.start [1/16] %v1884, 128
        %1903 = vxpose.xlu0.b32.cont [2/16] %v1889, 128
        %1904 = vxpose.xlu0.b32.cont [3/16] %v1894, 128
        %1905 = vxpose.xlu0.b32.cont [4/16] %v1899, 128
        %1906 = vxpose.xlu0.b32.cont [5/16] 0.0, 128
        %1907 = vxpose.xlu0.b32.cont [6/16] 0.0, 128
        %1908 = vxpose.xlu0.b32.cont [7/16] 0.0, 128
        %1909 = vxpose.xlu0.b32.cont [8/16] 0.0, 128
        %1910 = vxpose.xlu0.b32.cont [9/16] 0.0, 128
        %1911 = vxpose.xlu0.b32.cont [10/16] 0.0, 128
        %1912 = vxpose.xlu0.b32.cont [11/16] 0.0, 128
        %1913 = vxpose.xlu0.b32.cont [12/16] 0.0, 128
        %1914 = vxpose.xlu0.b32.cont [13/16] 0.0, 128
        %1915 = vxpose.xlu0.b32.cont [14/16] 0.0, 128
        %1916 = vxpose.xlu0.b32.cont [15/16] 0.0, 128
        %1917 = vxpose.xlu0.b32.end [16/16] 0.0, 128
        %v1918 = vpop.trf.xlu0
        %v1919 = vpop.trf.xlu0
        %v1920 = vpop.trf.xlu0
        %v1921 = vpop.trf.xlu0
        %v1922 = vpop.trf.xlu0
        %v1923 = vpop.trf.xlu0
        %v1924 = vpop.trf.xlu0
        %v1925 = vpop.trf.xlu0
        %v1926 = vpop.trf.xlu0
        %v1927 = vpop.trf.xlu0
        %v1928 = vpop.trf.xlu0
        %v1929 = vpop.trf.xlu0
        %v1930 = vpop.trf.xlu0
        %v1931 = vpop.trf.xlu0
        %v1932 = vpop.trf.xlu0
        %v1933 = vpop.trf.xlu0
        %v1934 = vld [vmem:[%s578] sm:$0xff]
        %v1935 = vadd.f32 %v1934, %v1918
        %v1936 = vld [vmem:[%s7] sm:$0x1]
        %v1937 = vld [vmem:[%s8] sm:$0x1]
        %v1938 = vsel %vm958, %v1935, 0.0
        %1939 = vadd.xlane.f32.xlu0 %v1938
        %v1940 = vpop.xlane.xlu0 %1939
        %v1941 = vrcp.pop 32.0
        %v1942 = vmul.f32 %v1940, %v1941
        %v1943 = vsub.f32 %v1935, %v1942
        %v1944 = vmul.f32 %v1943, %v1943
        %v1945 = vsel %vm958, %v1944, 0.0
        %1946 = vadd.xlane.f32.xlu0 %v1945
        %v1947 = vpop.xlane.xlu0 %1946
        %v1948 = vmul.f32 %v1947, %v1941
        %v1949 = vadd.f32 %v1948, 1e-06
        %v1950 = vrsqrt.pop %v1949
        %v1951 = vmul.f32 %v1943, %v1950
        %v1953 = vlaneseq
        %v1954 = vshrl.u32 %v1953, 7
        %v1955 = vsub.s32 0, %v1954
        %v1956 = vrot.slane %v1936, %v1955
        %v1958 = vmul.f32 %v1951, %v1956
        %v1960 = vlaneseq
        %v1961 = vshrl.u32 %v1960, 7
        %v1962 = vsub.s32 0, %v1961
        %v1963 = vrot.slane %v1937, %v1962
        %v1965 = vadd.f32 %v1958, %v1963
        %v1966 = vld [vmem:[%s9] sm:$0xff]
        %v1967 = vld [vmem:[%s9 + $0x8] sm:$0xff]
        %v1968 = vld [vmem:[%s9 + $0x10] sm:$0xff]
        %v1969 = vld [vmem:[%s9 + $0x18] sm:$0xff]
        %v1970 = vld [vmem:[%s10] sm:$0x1]
        %v1972 = vlaneseq
        %v1973 = vshrl.u32 %v1972, 7
        %v1974 = vsub.s32 0, %v1973
        %v1975 = vrot.slane %v1970, %v1974
        %v1978 = vsel %vm958, %v1965, 0
        %1980 = vmatprep.subr.mxu0 0.0
        %1981 = vmatpush1.msra.mxu0 0.0
        %1982 = vmatprep.subr.mxu0 0.0
        %1983 = vmatpush1.msra.mxu0 0.0
        %1984 = vmatprep.subr.mxu0 0.0
        %1985 = vmatpush1.msra.mxu0 0.0
        %1986 = vmatprep.subr.mxu0 0.0
        %1987 = vmatpush1.msra.mxu0 0.0
        %1988 = vmatprep.subr.mxu0 0.0
        %1989 = vmatpush1.msra.mxu0 0.0
        %1990 = vmatprep.subr.mxu0 0.0
        %1991 = vmatpush1.msra.mxu0 0.0
        %1992 = vmatprep.subr.mxu0 0.0
        %1993 = vmatpush1.msra.mxu0 0.0
        %1994 = vmatprep.subr.mxu0 0.0
        %1995 = vmatpush1.msra.mxu0 0.0
        %1996 = vmatprep.subr.mxu0 0.0
        %1997 = vmatpush1.msra.mxu0 0.0
        %1998 = vmatprep.subr.mxu0 0.0
        %1999 = vmatpush1.msra.mxu0 0.0
        %2000 = vmatprep.subr.mxu0 0.0
        %2001 = vmatpush1.msra.mxu0 0.0
        %2002 = vmatprep.subr.mxu0 0.0
        %2003 = vmatpush1.msra.mxu0 0.0
        %2004 = vmatprep.subr.mxu0 0.0
        %2005 = vmatpush1.msra.mxu0 %v1969
        %2006 = vmatprep.subr.mxu0 0.0
        %2007 = vmatpush1.msra.mxu0 %v1968
        %2008 = vmatprep.subr.mxu0 0.0
        %2009 = vmatpush1.msra.mxu0 %v1967
        %2010 = vmatprep.subr.mxu0 0.0
        %2011 = vmatpush1.msra.mxu0 %v1966
        %2012 = vmatprep.subr.mxu0 0.0
        %2013 = vmatpush2.msra.mxu0 0.0
        %2014 = vmatprep.subr.mxu0 0.0
        %2015 = vmatpush2.msra.mxu0 0.0
        %2016 = vmatprep.subr.mxu0 0.0
        %2017 = vmatpush2.msra.mxu0 0.0
        %2018 = vmatprep.subr.mxu0 0.0
        %2019 = vmatpush2.msra.mxu0 0.0
        %2020 = vmatprep.subr.mxu0 0.0
        %2021 = vmatpush2.msra.mxu0 0.0
        %2022 = vmatprep.subr.mxu0 0.0
        %2023 = vmatpush2.msra.mxu0 0.0
        %2024 = vmatprep.subr.mxu0 0.0
        %2025 = vmatpush2.msra.mxu0 0.0
        %2026 = vmatprep.subr.mxu0 0.0
        %2027 = vmatpush2.msra.mxu0 0.0
        %2028 = vmatprep.subr.mxu0 0.0
        %2029 = vmatpush2.msra.mxu0 0.0
        %2030 = vmatprep.subr.mxu0 0.0
        %2031 = vmatpush2.msra.mxu0 0.0
        %2032 = vmatprep.subr.mxu0 0.0
        %2033 = vmatpush2.msra.mxu0 0.0
        %2034 = vmatprep.subr.mxu0 0.0
        %2035 = vmatpush2.msra.mxu0 0.0
        %2036 = vmatprep.subr.mxu0 0.0
        %2037 = vmatpush2.msra.mxu0 0.0
        %2038 = vmatprep.subr.mxu0 0.0
        %2039 = vmatpush2.msra.mxu0 0.0
        %2040 = vmatprep.subr.mxu0 0.0
        %2041 = vmatpush2.msra.mxu0 0.0
        %2042 = vmatprep.subr.mxu0 0.0
        %2043 = vmatpush2.msra.mxu0 0.0
        %2044 = vmatprep.mubr.f32.mxu0 0.0
        %2045 = vmatmul.mubr.f32.gmra.mxu0 %v1978
        %v2046 = vpop.f32.mrf.mxu0
        %v2047 = vadd.f32 %v1975, %v2046
        %v2048 = vpop.f32.mrf.mxu0
        %2049 = vdwg.mxu0
        %v2050 = vmax.f32 %v2047, 0.0
        %v2051 = vld [vmem:[%s11] sm:$0xff]
        %v2052 = vld [vmem:[%s11 + $0x8] sm:$0xff]
        %v2053 = vld [vmem:[%s11 + $0x10] sm:$0xff]
        %v2054 = vld [vmem:[%s11 + $0x18] sm:$0xff]
        %v2055 = vld [vmem:[%s11 + $0x20] sm:$0xff]
        %v2056 = vld [vmem:[%s11 + $0x28] sm:$0xff]
        %v2057 = vld [vmem:[%s11 + $0x30] sm:$0xff]
        %v2058 = vld [vmem:[%s11 + $0x38] sm:$0xff]
        %v2059 = vld [vmem:[%s12] sm:$0x1]
        %v2061 = vlaneseq
        %v2062 = vshrl.u32 %v2061, 7
        %v2063 = vsub.s32 0, %v2062
        %v2064 = vrot.slane %v2059, %v2063
        %v2067 = vsel %vm1804, %v2050, 0
        %2069 = vmatprep.subr.mxu0 0.0
        %2070 = vmatpush1.msra.mxu0 0.0
        %2071 = vmatprep.subr.mxu0 0.0
        %2072 = vmatpush1.msra.mxu0 0.0
        %2073 = vmatprep.subr.mxu0 0.0
        %2074 = vmatpush1.msra.mxu0 0.0
        %2075 = vmatprep.subr.mxu0 0.0
        %2076 = vmatpush1.msra.mxu0 0.0
        %2077 = vmatprep.subr.mxu0 0.0
        %2078 = vmatpush1.msra.mxu0 0.0
        %2079 = vmatprep.subr.mxu0 0.0
        %2080 = vmatpush1.msra.mxu0 0.0
        %2081 = vmatprep.subr.mxu0 0.0
        %2082 = vmatpush1.msra.mxu0 0.0
        %2083 = vmatprep.subr.mxu0 0.0
        %2084 = vmatpush1.msra.mxu0 0.0
        %2085 = vmatprep.subr.mxu0 0.0
        %2086 = vmatpush1.msra.mxu0 %v2058
        %2087 = vmatprep.subr.mxu0 0.0
        %2088 = vmatpush1.msra.mxu0 %v2057
        %2089 = vmatprep.subr.mxu0 0.0
        %2090 = vmatpush1.msra.mxu0 %v2056
        %2091 = vmatprep.subr.mxu0 0.0
        %2092 = vmatpush1.msra.mxu0 %v2055
        %2093 = vmatprep.subr.mxu0 0.0
        %2094 = vmatpush1.msra.mxu0 %v2054
        %2095 = vmatprep.subr.mxu0 0.0
        %2096 = vmatpush1.msra.mxu0 %v2053
        %2097 = vmatprep.subr.mxu0 0.0
        %2098 = vmatpush1.msra.mxu0 %v2052
        %2099 = vmatprep.subr.mxu0 0.0
        %2100 = vmatpush1.msra.mxu0 %v2051
        %2101 = vmatprep.subr.mxu0 0.0
        %2102 = vmatpush2.msra.mxu0 0.0
        %2103 = vmatprep.subr.mxu0 0.0
        %2104 = vmatpush2.msra.mxu0 0.0
        %2105 = vmatprep.subr.mxu0 0.0
        %2106 = vmatpush2.msra.mxu0 0.0
        %2107 = vmatprep.subr.mxu0 0.0
        %2108 = vmatpush2.msra.mxu0 0.0
        %2109 = vmatprep.subr.mxu0 0.0
        %2110 = vmatpush2.msra.mxu0 0.0
        %2111 = vmatprep.subr.mxu0 0.0
        %2112 = vmatpush2.msra.mxu0 0.0
        %2113 = vmatprep.subr.mxu0 0.0
        %2114 = vmatpush2.msra.mxu0 0.0
        %2115 = vmatprep.subr.mxu0 0.0
        %2116 = vmatpush2.msra.mxu0 0.0
        %2117 = vmatprep.subr.mxu0 0.0
        %2118 = vmatpush2.msra.mxu0 0.0
        %2119 = vmatprep.subr.mxu0 0.0
        %2120 = vmatpush2.msra.mxu0 0.0
        %2121 = vmatprep.subr.mxu0 0.0
        %2122 = vmatpush2.msra.mxu0 0.0
        %2123 = vmatprep.subr.mxu0 0.0
        %2124 = vmatpush2.msra.mxu0 0.0
        %2125 = vmatprep.subr.mxu0 0.0
        %2126 = vmatpush2.msra.mxu0 0.0
        %2127 = vmatprep.subr.mxu0 0.0
        %2128 = vmatpush2.msra.mxu0 0.0
        %2129 = vmatprep.subr.mxu0 0.0
        %2130 = vmatpush2.msra.mxu0 0.0
        %2131 = vmatprep.subr.mxu0 0.0
        %2132 = vmatpush2.msra.mxu0 0.0
        %2133 = vmatprep.mubr.f32.mxu0 0.0
        %2134 = vmatmul.mubr.f32.gmra.mxu0 %v2067
        %v2135 = vpop.f32.mrf.mxu0
        %v2136 = vadd.f32 %v2064, %v2135
        %v2137 = vpop.f32.mrf.mxu0
        %2138 = vdwg.mxu0
        %v2139 = vadd.f32 %v1965, %v2136
        %v2140 = vld [vmem:[%s13] sm:$0x1]
        %v2141 = vld [vmem:[%s14] sm:$0x1]
        %v2142 = vsel %vm958, %v2139, 0.0
        %2143 = vadd.xlane.f32.xlu0 %v2142
        %v2144 = vpop.xlane.xlu0 %2143
        %v2145 = vmul.f32 %v2144, %v1941
        %v2146 = vsub.f32 %v2139, %v2145
        %v2147 = vmul.f32 %v2146, %v2146
        %v2148 = vsel %vm958, %v2147, 0.0
        %2149 = vadd.xlane.f32.xlu0 %v2148
        %v2150 = vpop.xlane.xlu0 %2149
        %v2151 = vmul.f32 %v2150, %v1941
        %v2152 = vadd.f32 %v2151, 1e-06
        %v2153 = vrsqrt.pop %v2152
        %v2154 = vmul.f32 %v2146, %v2153
        %v2156 = vlaneseq
        %v2157 = vshrl.u32 %v2156, 7
        %v2158 = vsub.s32 0, %v2157
        %v2159 = vrot.slane %v2140, %v2158
        %v2161 = vmul.f32 %v2154, %v2159
        %v2163 = vlaneseq
        %v2164 = vshrl.u32 %v2163, 7
        %v2165 = vsub.s32 0, %v2164
        %v2166 = vrot.slane %v2141, %v2165
        %v2168 = vadd.f32 %v2161, %v2166
        %2169 = vst.msk [vmem:[%s558] sm:$0xff] %vm958, %v2168
        %s2170 = sand.u32 %s390, 1
        %s2171 = scalar_lea.sflag [#allocation5], %s2170
        %s2172 = sand.u32 %s390, 1
        %s2173 = smul.addr %s2172, 8
        %s2174 = scalar_lea.vmem [#allocation4], %s2173
        // Predicated region
        $region85: #{tpu_custom_call.1} parent=79 // pred_check
          %p2175 = pneg %p400
        $region86: #{tpu_custom_call.1} parent=79 // pred_check_branch
          %2177 = sbr.rel (%p2175) target = $region88
        $region87: #{tpu_custom_call.1} parent=79 // pred_region
          %s2179 = ssub.s32 128, 128
          %2180 = vsyncadd %s2171, %s2179
          %s2181 = sadd.s32 %s34, %s33
          %s2182 = smul.addr %s2181, 128
          %s2183 = scalar_lea.hbm %s15, %s2182
          %s2185 = sshll.u32 %s2174, 4
          %s2186 = int_to_ptr.vmem [resolvable:$true] %s2185
          %2188 = dma.vmem_to_hbm [thread:$0]  %s2186, 128, %s2183, %s2171
        $region88: #{tpu_custom_call.1} parent=79 // pred_fallthru
          _
      $region80: #{tpu_custom_call.1} parent=5 // pred_fallthru
        _
      %p2189 = scmp.le.s32.totalorder 2, %s24
      // Predicated region
      $region89: #{tpu_custom_call.1} parent=5 // pred_check
        %p2190 = pneg %p2189
      $region90: #{tpu_custom_call.1} parent=5 // pred_check_branch
        %2192 = sbr.rel (%p2190) target = $region92
      $region91: #{tpu_custom_call.1} parent=5 // pred_region
        %s2193 = ssub.s32 %s24, 2
        // Predicated region
        $region93: #{tpu_custom_call.1} parent=91 // pred_check
          %p2194 = pneg %p406
        $region94: #{tpu_custom_call.1} parent=91 // pred_check_branch
          %2196 = sbr.rel (%p2194) target = $region96
        $region95: #{tpu_custom_call.1} parent=91 // pred_region
          %s2197 = sand.u32 %s391, 1
          %s2198 = scalar_lea.sflag [#allocation5], %s2197
          %s2199 = sand.u32 %s391, 1
          %s2200 = smul.addr %s2199, 8
          %s2201 = scalar_lea.vmem [#allocation4], %s2200
          %2202 = dma.done %s2198, 128
        $region96: #{tpu_custom_call.1} parent=91 // pred_fallthru
          _
      $region92: #{tpu_custom_call.1} parent=5 // pred_fallthru
        _
    $region6: #{tpu_custom_call.1} parent=1 // loop_footer
      %s28 = sadd.s32 1, %s24
    $region7: #{tpu_custom_call.1} parent=1 // loop_footer_branch
      %23 = sbr.rel target = $region3
    $region8: #{tpu_custom_call.1} parent=1 // loop_exit
      _
    %2203 = vsyncpa [#allocation5], 1
    %s2204 = scalar_lea.sflag [#allocation5], 1
    %2205 = vsyncpa %s2204, 1

</llo_original>
